<compile_context>
chip_gen: v5e
topology: v5e:2x2
jax: 0.10.0
libtpu: 0.0.40
codegen_flags: <defaults>
</compile_context>

<pallas_src>
import functools

import jax
import jax.numpy as jnp
import numpy as np
from jax.experimental import pallas as pl
from jax.experimental.pallas import tpu as pltpu


_SQRT_2_OVER_PI = 0.7978845608028654
_LN_EPS = 1e-6


def _gelu_tanh(x):
    return 0.5 * x * (1.0 + jnp.tanh(_SQRT_2_OVER_PI * (x + 0.044715 * x * x * x)))


# ------------------------------- Pallas kernel -------------------------------

def _mask_downsampler_kernel(xin_ref, a1m_ref, b1m_ref, wa2_ref, wb2_ref,
                             w3a_ref, w3b_ref, w3c_ref, w4b_ref,
                             m1_ref, m2_ref, m3_ref,
                             p1_ref, p2_ref, p3_ref, b4_ref,
                             o_ref, xq2_scr, xp3_scr, *, h2, eps):
    """Fused MaskDownSampler forward for one batch element.

    xin_ref : (1, H//4 + 2, 4*W)   quad-row packed, zero-padded input rows
    a1m/b1m : (4W, 2*L1)           layer-1 folded weights (produce packed L2 in)
    wa2/wb2 : (2*L1, L2)           layer-2 folded weights
    w3a/b/c : (L2, L3)             layer-3 folded weights (per dy)
    w4b     : (L3, W2*E)           block-diagonal final 1x1 conv
    m1/2/3  : block-diag averaging matrices for per-pixel LayerNorm
    p1/2/3  : (3, lanes)           [bias; gamma; beta] tiled over pixels
    b4      : (1, W2*E)
    o_ref   : (1, H2, W2*E)
    """
    f32 = jnp.float32

    def ln_gelu(y, m_ref, p_ref):
        # One-pass LayerNorm over each pixel's channel group: per-group mean
        # and E[x^2] via a block-diagonal averaging matmul (idle MXU), then
        # var = E[x^2] - mu^2, scale/shift, GELU (tanh form).
        mu = jnp.dot(y, m_ref[...], preferred_element_type=f32)
        ms = jnp.dot(y * y, m_ref[...], preferred_element_type=f32)
        var = jnp.maximum(ms - mu * mu, 0.0)
        yn = (y - mu) * jax.lax.rsqrt(var + eps) * p_ref[1:2, :] + p_ref[2:3, :]
        return _gelu_tanh(yn)

    # ---- layer 1: 3x3 / stride-2 conv (1 -> 16) + LN + GELU, written directly
    #      in the row-pair-packed layout layer 2 consumes.
    x_lo = xin_ref[0, 0:h2 + 1, :]                       # (H2+1, 4W)
    x_hi = xin_ref[0, 1:h2 + 2, :]
    y1 = (jnp.dot(x_lo, a1m_ref[...], preferred_element_type=f32)
          + jnp.dot(x_hi, b1m_ref[...], preferred_element_type=f32)
          + p1_ref[0:1, :])                              # (H2+1, 2*L1)
    xq2_scr[...] = ln_gelu(y1, m1_ref, p1_ref)
    # The first half of row 0 is layer-2's top zero-pad row: keep it exactly 0
    # (LN+GELU of the zero row would otherwise turn it into gelu(beta)).
    half = xq2_scr.shape[1] // 2
    xq2_scr[0:1, 0:half] = jnp.zeros((1, half), f32)

    # ---- layer 2: 3x3 / stride-2 conv (16 -> 32) + LN + GELU, stored into a
    #      zero-row-padded plane for the stride-1 layer 3.
    y2 = (jnp.dot(xq2_scr[0:h2, :], wa2_ref[...], preferred_element_type=f32)
          + jnp.dot(xq2_scr[1:h2 + 1, :], wb2_ref[...], preferred_element_type=f32)
          + p2_ref[0:1, :])                              # (H2, L2)
    xp3_scr[...] = jnp.zeros(xp3_scr.shape, f32)
    xp3_scr[1:h2 + 1, :] = ln_gelu(y2, m2_ref, p2_ref)

    # ---- layer 3: 3x3 / stride-1 conv (32 -> 64) + LN + GELU + fused 1x1.
    y3 = (jnp.dot(xp3_scr[0:h2, :], w3a_ref[...], preferred_element_type=f32)
          + jnp.dot(xp3_scr[1:h2 + 1, :], w3b_ref[...], preferred_element_type=f32)
          + jnp.dot(xp3_scr[2:h2 + 2, :], w3c_ref[...], preferred_element_type=f32)
          + p3_ref[0:1, :])                              # (H2, L3)
    h3 = ln_gelu(y3, m3_ref, p3_ref)
    o_ref[0] = (jnp.dot(h3, w4b_ref[...], preferred_element_type=f32)
                + b4_ref[...]).astype(o_ref.dtype)


# ----------------------------- weight folding helpers ------------------------

def _fold_conv_weight(w, stride, w_in, w_out):
    """HWIO conv weight (3,3,cin,cout) -> 3 per-dy matrices of shape
    (w_in*cin, w_out*cout) that fold the dx taps, the column stride and the
    width zero-padding (out-of-range taps simply dropped)."""
    kh, kw, cin, cout = w.shape
    dx = np.arange(kw)[:, None, None]
    q = np.arange(w_in)[None, :, None]
    j = np.arange(w_out)[None, None, :]
    sel = jnp.asarray((q == stride * j + dx - 1).astype(np.float32))  # (3,w_in,w_out)
    mats = []
    for dy in range(kh):
        m = jnp.einsum("xqj,xcd->qcjd", sel, w[dy])       # (w_in,cin,w_out,cout)
        mats.append(m.reshape(w_in * cin, w_out * cout))
    return mats


def _group_avg_matrix(num_groups, group_size):
    """Block-diagonal per-group averaging matrix (for LN channel reductions)."""
    n = num_groups * group_size
    m = np.zeros((n, n), np.float32)
    for g in range(num_groups):
        m[g * group_size:(g + 1) * group_size,
          g * group_size:(g + 1) * group_size] = 1.0 / group_size
    return jnp.asarray(m)


# --------------------------------- wrapper -----------------------------------

def mask_downsampler_forward(x_nchw, params):
    """MaskDownSampler forward.  Input/output NCHW to match the PyTorch module."""
    x = jnp.transpose(x_nchw, (0, 2, 3, 1)).astype(jnp.float32)   # -> NHWC
    n, h, wd, cin = x.shape
    assert cin == 1 and h % 4 == 0 and wd % 4 == 0
    wd1, wd2 = wd // 2, wd // 4
    h2 = h // 4
    c1, c2, c3 = 16, 32, 64
    e = params["w4"].shape[-1]
    l1, l2, l3 = wd1 * c1, wd2 * c2, wd2 * c3
    f32 = jnp.float32

    # --- pack the 1-channel input: H zero-pad rows + quad-row packing.
    # Row sequence = 4 zero rows (leading packed pad) + [pad row, x rows, pad
    # row] + 2 zero rows (fill) -> (H+8) rows -> (H//4 + 2) quads of 4W lanes.
    x_rows = jnp.pad(x[..., 0], ((0, 0), (5, 3), (0, 0)))          # (N, H+8, W)
    nq = (h + 8) // 4
    x_packed = x_rows.reshape(n, nq, 4 * wd)

    # --- layer 1 folded weights: produce the layer-2 packed input directly.
    w1m = _fold_conv_weight(params["w1"].astype(f32), 2, wd, wd1)  # 3 x (W, L1)
    zw = jnp.zeros_like(w1m[0])                                    # (W, L1)
    wa1 = jnp.concatenate([w1m[0], w1m[1]], axis=0)                # (2W, L1)
    wb1 = jnp.concatenate([w1m[2], zw], axis=0)                    # (2W, L1)
    z2w = jnp.zeros((2 * wd, l1), f32)
    a1m = jnp.concatenate(
        [jnp.concatenate([z2w, z2w], axis=1),
         jnp.concatenate([wa1, z2w], axis=1)], axis=0)             # (4W, 2*L1)
    b1m = jnp.concatenate(
        [jnp.concatenate([wb1, wa1], axis=1),
         jnp.concatenate([z2w, wb1], axis=1)], axis=0)             # (4W, 2*L1)

    # --- layer 2 folded weights (stride 2, consumes row-pair packed input).
    w2m = _fold_conv_weight(params["w2"].astype(f32), 2, wd1, wd2)  # 3 x (L1, L2)
    wa2 = jnp.concatenate([w2m[0], w2m[1]], axis=0)                 # (2*L1, L2)
    wb2 = jnp.concatenate([w2m[2], jnp.zeros_like(w2m[2])], axis=0)

    # --- layer 3 folded weights (stride 1).
    w3m = _fold_conv_weight(params["w3"].astype(f32), 1, wd2, wd2)  # 3 x (L2, L3)

    # --- final 1x1 conv as a block-diagonal matrix.
    w4b = jnp.kron(jnp.eye(wd2, dtype=f32), params["w4"].astype(f32))  # (L3, W2*E)

    # --- LayerNorm averaging matrices (per-pixel channel groups).
    m1 = _group_avg_matrix(2 * wd1, c1)    # (2*L1, 2*L1)
    m2 = _group_avg_matrix(wd2, c2)        # (L2, L2)
    m3 = _group_avg_matrix(wd2, c3)        # (L3, L3)

    # --- per-layer [bias; gamma; beta] tiled over pixels (lane layout j*C+c).
    def tile3(b_, g_, bt_, reps):
        return jnp.stack([jnp.tile(b_, reps), jnp.tile(g_, reps),
                          jnp.tile(bt_, reps)]).astype(f32)

    p1 = tile3(params["b1"], params["g1"], params["bt1"], 2 * wd1)  # (3, 2*L1)
    p2 = tile3(params["b2"], params["g2"], params["bt2"], wd2)      # (3, L2)
    p3 = tile3(params["b3"], params["g3"], params["bt3"], wd2)      # (3, L3)
    b4t = jnp.tile(params["b4"], wd2).reshape(1, wd2 * e).astype(f32)

    const2 = lambda bi: (0, 0)
    kern = functools.partial(_mask_downsampler_kernel, h2=h2, eps=_LN_EPS)
    out = pl.pallas_call(
        kern,
        out_shape=jax.ShapeDtypeStruct((n, h2, wd2 * e), jnp.float32),
        grid_spec=pltpu.PrefetchScalarGridSpec(
            num_scalar_prefetch=0,
            grid=(n,),
            in_specs=[
                pl.BlockSpec((1, nq, 4 * wd), lambda bi: (bi, 0, 0)),
                pl.BlockSpec(a1m.shape, const2),
                pl.BlockSpec(b1m.shape, const2),
                pl.BlockSpec(wa2.shape, const2),
                pl.BlockSpec(wb2.shape, const2),
                pl.BlockSpec(w3m[0].shape, const2),
                pl.BlockSpec(w3m[1].shape, const2),
                pl.BlockSpec(w3m[2].shape, const2),
                pl.BlockSpec(w4b.shape, const2),
                pl.BlockSpec(m1.shape, const2),
                pl.BlockSpec(m2.shape, const2),
                pl.BlockSpec(m3.shape, const2),
                pl.BlockSpec(p1.shape, const2),
                pl.BlockSpec(p2.shape, const2),
                pl.BlockSpec(p3.shape, const2),
                pl.BlockSpec(b4t.shape, const2),
            ],
            out_specs=pl.BlockSpec((1, h2, wd2 * e), lambda bi: (bi, 0, 0)),
            scratch_shapes=[
                pltpu.VMEM((h2 + 1, 2 * l1), jnp.float32),   # packed layer-2 input
                pltpu.VMEM((h2 + 2, l2), jnp.float32),       # padded layer-3 input
            ],
        ),
        compiler_params=pltpu.CompilerParams(
            dimension_semantics=("parallel",)),
    )(x_packed, a1m, b1m, wa2, wb2, w3m[0], w3m[1], w3m[2], w4b,
      m1, m2, m3, p1, p2, p3, b4t)

    out = out.reshape(n, h2, wd2, e)
    return jnp.transpose(out, (0, 3, 1, 2))                         # -> NCHW


# --------------------------- params & pure-JAX ref ---------------------------

def init_params(key, embed_dim=64):
    cp = [1, 16, 32, 64]
    ks = jax.random.split(key, 14)

    def conv_w(k, kh, cin, cout):
        fan_in = kh * kh * cin
        return jax.random.normal(k, (kh, kh, cin, cout), jnp.float32) / np.sqrt(fan_in)

    p = {}
    for i in range(3):
        cin, cout = cp[i], cp[i + 1]
        p[f"w{i+1}"] = conv_w(ks[4 * i], 3, cin, cout)
        p[f"b{i+1}"] = 0.1 * jax.random.normal(ks[4 * i + 1], (cout,), jnp.float32)
        p[f"g{i+1}"] = 1.0 + 0.1 * jax.random.normal(ks[4 * i + 2], (cout,), jnp.float32)
        p[f"bt{i+1}"] = 0.1 * jax.random.normal(ks[4 * i + 3], (cout,), jnp.float32)
    p["w4"] = jax.random.normal(ks[12], (cp[-1], embed_dim), jnp.float32) / np.sqrt(cp[-1])
    p["b4"] = 0.1 * jax.random.normal(ks[13], (embed_dim,), jnp.float32)
    return p


def _layer_norm_channels(y, gamma, beta, eps):
    u = jnp.mean(y, axis=-1, keepdims=True)
    d = y - u
    var = jnp.mean(d * d, axis=-1, keepdims=True)
    return d * jax.lax.rsqrt(var + eps) * gamma + beta


def _conv_ref(x, w, b, stride, pad):
    y = jax.lax.conv_general_dilated(
        x, w, window_strides=(stride, stride), padding=((pad, pad), (pad, pad)),
        dimension_numbers=("NHWC", "HWIO", "NHWC"))
    return y + b.reshape(1, 1, 1, -1)


def ref_forward(x_nchw, p):
    x = jnp.transpose(x_nchw, (0, 2, 3, 1)).astype(jnp.float32)
    x = _gelu_tanh(_layer_norm_channels(_conv_ref(x, p["w1"], p["b1"], 2, 1),
                                        p["g1"], p["bt1"], _LN_EPS))
    x = _gelu_tanh(_layer_norm_channels(_conv_ref(x, p["w2"], p["b2"], 2, 1),
                                        p["g2"], p["bt2"], _LN_EPS))
    x = _gelu_tanh(_layer_norm_channels(_conv_ref(x, p["w3"], p["b3"], 1, 1),
                                        p["g3"], p["bt3"], _LN_EPS))
    x = jnp.einsum("nhwc,cd->nhwd", x, p["w4"]) + p["b4"]
    return jnp.transpose(x, (0, 3, 1, 2))


# ----------------------------------- main ------------------------------------

if __name__ == "__main__":
    key = jax.random.PRNGKey(0)
    k_x, k_p = jax.random.split(key)

    # NCHW mask input: batch=2, 1 channel, 16x16 spatial.
    x = jax.random.normal(k_x, (2, 1, 16, 16), jnp.float32)
    params = init_params(k_p)

    fwd = jax.jit(mask_downsampler_forward)
    out = jax.block_until_ready(fwd(x, params))
    assert out.shape == (2, 64, 4, 4), out.shape

    ref = jax.block_until_ready(ref_forward(x, params))
    np.testing.assert_allclose(np.asarray(out), np.asarray(ref),
                               rtol=1e-3, atol=1e-3)

    print("KERNEL_OK")
</pallas_src>

<mosaic_0001>
module attributes {stable_mosaic.version = 11 : i64} {
  func.func @_mask_downsampler_kernel(%arg0: i32, %arg1: memref<1x6x64xf32, #tpu.memory_space<vmem>>, %arg2: memref<64x256xf32, #tpu.memory_space<vmem>>, %arg3: memref<64x256xf32, #tpu.memory_space<vmem>>, %arg4: memref<256x128xf32, #tpu.memory_space<vmem>>, %arg5: memref<256x128xf32, #tpu.memory_space<vmem>>, %arg6: memref<128x256xf32, #tpu.memory_space<vmem>>, %arg7: memref<128x256xf32, #tpu.memory_space<vmem>>, %arg8: memref<128x256xf32, #tpu.memory_space<vmem>>, %arg9: memref<256x256xf32, #tpu.memory_space<vmem>>, %arg10: memref<256x256xf32, #tpu.memory_space<vmem>>, %arg11: memref<128x128xf32, #tpu.memory_space<vmem>>, %arg12: memref<256x256xf32, #tpu.memory_space<vmem>>, %arg13: memref<3x256xf32, #tpu.memory_space<vmem>>, %arg14: memref<3x128xf32, #tpu.memory_space<vmem>>, %arg15: memref<3x256xf32, #tpu.memory_space<vmem>>, %arg16: memref<1x256xf32, #tpu.memory_space<vmem>>, %arg17: memref<1x4x256xf32, #tpu.memory_space<vmem>>, %arg18: memref<5x256xf32, #tpu.memory_space<vmem>>, %arg19: memref<6x128xf32, #tpu.memory_space<vmem>>) attributes {dimension_semantics = [#tpu.dimension_semantics<parallel>], iteration_bounds = array<i64: 2>, scalar_prefetch = 0 : i64, scratch_operands = 2 : i64, tpu.core_type = #tpu.core_type<tc>, window_params = [{transform_indices = @transform_0, window_bounds = array<i64: 1, 6, 64>}, {pipeline_mode = #tpu.pipeline_mode<synchronous>, transform_indices = @transform_1, window_bounds = array<i64: 64, 256>}, {pipeline_mode = #tpu.pipeline_mode<synchronous>, transform_indices = @transform_2, window_bounds = array<i64: 64, 256>}, {pipeline_mode = #tpu.pipeline_mode<synchronous>, transform_indices = @transform_3, window_bounds = array<i64: 256, 128>}, {pipeline_mode = #tpu.pipeline_mode<synchronous>, transform_indices = @transform_4, window_bounds = array<i64: 256, 128>}, {pipeline_mode = #tpu.pipeline_mode<synchronous>, transform_indices = @transform_5, window_bounds = array<i64: 128, 256>}, {pipeline_mode = #tpu.pipeline_mode<synchronous>, transform_indices = @transform_6, window_bounds = array<i64: 128, 256>}, {pipeline_mode = #tpu.pipeline_mode<synchronous>, transform_indices = @transform_7, window_bounds = array<i64: 128, 256>}, {pipeline_mode = #tpu.pipeline_mode<synchronous>, transform_indices = @transform_8, window_bounds = array<i64: 256, 256>}, {pipeline_mode = #tpu.pipeline_mode<synchronous>, transform_indices = @transform_9, window_bounds = array<i64: 256, 256>}, {pipeline_mode = #tpu.pipeline_mode<synchronous>, transform_indices = @transform_10, window_bounds = array<i64: 128, 128>}, {pipeline_mode = #tpu.pipeline_mode<synchronous>, transform_indices = @transform_11, window_bounds = array<i64: 256, 256>}, {pipeline_mode = #tpu.pipeline_mode<synchronous>, transform_indices = @transform_12, window_bounds = array<i64: 3, 256>}, {pipeline_mode = #tpu.pipeline_mode<synchronous>, transform_indices = @transform_13, window_bounds = array<i64: 3, 128>}, {pipeline_mode = #tpu.pipeline_mode<synchronous>, transform_indices = @transform_14, window_bounds = array<i64: 3, 256>}, {pipeline_mode = #tpu.pipeline_mode<synchronous>, transform_indices = @transform_15, window_bounds = array<i64: 1, 256>}, {transform_indices = @transform_16, window_bounds = array<i64: 1, 4, 256>}]} {
    %c0 = arith.constant 0 : index
    %c0_0 = arith.constant 0 : index
    %c0_1 = arith.constant 0 : index
    %0 = vector.load %arg1[%c0, %c0_0, %c0_1] : memref<1x6x64xf32, #tpu.memory_space<vmem>>, vector<1x5x64xf32>
    %1 = vector.shape_cast %0 : vector<1x5x64xf32> to vector<5x64xf32>
    %c0_2 = arith.constant 0 : index
    %c1 = arith.constant 1 : index
    %c0_3 = arith.constant 0 : index
    %2 = vector.load %arg1[%c0_2, %c1, %c0_3] : memref<1x6x64xf32, #tpu.memory_space<vmem>>, vector<1x5x64xf32>
    %3 = vector.shape_cast %2 : vector<1x5x64xf32> to vector<5x64xf32>
    %c0_4 = arith.constant 0 : index
    %c0_5 = arith.constant 0 : index
    %4 = vector.load %arg2[%c0_4, %c0_5] : memref<64x256xf32, #tpu.memory_space<vmem>>, vector<64x256xf32>
    %cst = arith.constant dense<0.000000e+00> : vector<5x256xf32>
    %5 = tpu.matmul %1, %4, %cst {dimension_numbers = #tpu.dot_dimension_numbers<[1], [0], [0], [1], [0, 0, 1, 1], [], []>} : vector<5x64xf32>, vector<64x256xf32>, vector<5x256xf32> -> vector<5x256xf32>
    %c0_6 = arith.constant 0 : index
    %c0_7 = arith.constant 0 : index
    %6 = vector.load %arg3[%c0_6, %c0_7] : memref<64x256xf32, #tpu.memory_space<vmem>>, vector<64x256xf32>
    %cst_8 = arith.constant dense<0.000000e+00> : vector<5x256xf32>
    %7 = tpu.matmul %3, %6, %cst_8 {dimension_numbers = #tpu.dot_dimension_numbers<[1], [0], [0], [1], [0, 0, 1, 1], [], []>} : vector<5x64xf32>, vector<64x256xf32>, vector<5x256xf32> -> vector<5x256xf32>
    %8 = arith.addf %5, %7 : vector<5x256xf32>
    %c0_9 = arith.constant 0 : index
    %c0_10 = arith.constant 0 : index
    %9 = vector.load %arg13[%c0_9, %c0_10] : memref<3x256xf32, #tpu.memory_space<vmem>>, vector<1x256xf32>
    %10 = vector.broadcast %9 : vector<1x256xf32> to vector<5x256xf32>
    %11 = arith.addf %8, %10 : vector<5x256xf32>
    %c0_11 = arith.constant 0 : index
    %c0_12 = arith.constant 0 : index
    %12 = vector.load %arg10[%c0_11, %c0_12] : memref<256x256xf32, #tpu.memory_space<vmem>>, vector<256x256xf32>
    %cst_13 = arith.constant dense<0.000000e+00> : vector<5x256xf32>
    %13 = tpu.matmul %11, %12, %cst_13 {dimension_numbers = #tpu.dot_dimension_numbers<[1], [0], [0], [1], [0, 0, 1, 1], [], []>} : vector<5x256xf32>, vector<256x256xf32>, vector<5x256xf32> -> vector<5x256xf32>
    %14 = arith.mulf %11, %11 : vector<5x256xf32>
    %c0_14 = arith.constant 0 : index
    %c0_15 = arith.constant 0 : index
    %15 = vector.load %arg10[%c0_14, %c0_15] : memref<256x256xf32, #tpu.memory_space<vmem>>, vector<256x256xf32>
    %cst_16 = arith.constant dense<0.000000e+00> : vector<5x256xf32>
    %16 = tpu.matmul %14, %15, %cst_16 {dimension_numbers = #tpu.dot_dimension_numbers<[1], [0], [0], [1], [0, 0, 1, 1], [], []>} : vector<5x256xf32>, vector<256x256xf32>, vector<5x256xf32> -> vector<5x256xf32>
    %17 = arith.mulf %13, %13 : vector<5x256xf32>
    %18 = arith.subf %16, %17 : vector<5x256xf32>
    %cst_17 = arith.constant 0.000000e+00 : f32
    %19 = vector.broadcast %cst_17 : f32 to vector<5x256xf32>
    %20 = arith.maximumf %18, %19 : vector<5x256xf32>
    %21 = arith.subf %11, %13 : vector<5x256xf32>
    %cst_18 = arith.constant 9.99999997E-7 : f32
    %22 = vector.broadcast %cst_18 : f32 to vector<5x256xf32>
    %23 = arith.addf %20, %22 : vector<5x256xf32>
    %24 = math.rsqrt %23 : vector<5x256xf32>
    %25 = arith.mulf %21, %24 : vector<5x256xf32>
    %c1_19 = arith.constant 1 : index
    %c0_20 = arith.constant 0 : index
    %26 = vector.load %arg13[%c1_19, %c0_20] : memref<3x256xf32, #tpu.memory_space<vmem>>, vector<1x256xf32>
    %27 = vector.broadcast %26 : vector<1x256xf32> to vector<5x256xf32>
    %28 = arith.mulf %25, %27 : vector<5x256xf32>
    %c2 = arith.constant 2 : index
    %c0_21 = arith.constant 0 : index
    %29 = vector.load %arg13[%c2, %c0_21] : memref<3x256xf32, #tpu.memory_space<vmem>>, vector<1x256xf32>
    %30 = vector.broadcast %29 : vector<1x256xf32> to vector<5x256xf32>
    %31 = arith.addf %28, %30 : vector<5x256xf32>
    %cst_22 = arith.constant 5.000000e-01 : f32
    %32 = vector.broadcast %cst_22 : f32 to vector<5x256xf32>
    %33 = arith.mulf %32, %31 : vector<5x256xf32>
    %cst_23 = arith.constant 4.471500e-02 : f32
    %34 = vector.broadcast %cst_23 : f32 to vector<5x256xf32>
    %35 = arith.mulf %34, %31 : vector<5x256xf32>
    %36 = arith.mulf %35, %31 : vector<5x256xf32>
    %37 = arith.mulf %36, %31 : vector<5x256xf32>
    %38 = arith.addf %31, %37 : vector<5x256xf32>
    %cst_24 = arith.constant 0.797884583 : f32
    %39 = vector.broadcast %cst_24 : f32 to vector<5x256xf32>
    %40 = arith.mulf %39, %38 : vector<5x256xf32>
    %41 = math.tanh %40 : vector<5x256xf32>
    %cst_25 = arith.constant 1.000000e+00 : f32
    %42 = vector.broadcast %cst_25 : f32 to vector<5x256xf32>
    %43 = arith.addf %42, %41 : vector<5x256xf32>
    %44 = arith.mulf %33, %43 : vector<5x256xf32>
    %c0_26 = arith.constant 0 : index
    %c0_27 = arith.constant 0 : index
    %45 = vector.load %arg18[%c0_26, %c0_27] : memref<5x256xf32, #tpu.memory_space<vmem>>, vector<5x256xf32>
    tpu.vector_store %arg18[%c0_26, %c0_27], %44 {strides = array<i32>} : memref<5x256xf32, #tpu.memory_space<vmem>>, vector<5x256xf32>,
    %cst_28 = arith.constant 0.000000e+00 : f32
    %46 = vector.broadcast %cst_28 : f32 to vector<1x128xf32>
    %c0_29 = arith.constant 0 : index
    %c0_30 = arith.constant 0 : index
    %47 = vector.load %arg18[%c0_29, %c0_30] : memref<5x256xf32, #tpu.memory_space<vmem>>, vector<1x128xf32>
    tpu.vector_store %arg18[%c0_29, %c0_30], %46 {strides = array<i32>} : memref<5x256xf32, #tpu.memory_space<vmem>>, vector<1x128xf32>,
    %c0_31 = arith.constant 0 : index
    %c0_32 = arith.constant 0 : index
    %48 = vector.load %arg18[%c0_31, %c0_32] : memref<5x256xf32, #tpu.memory_space<vmem>>, vector<4x256xf32>
    %c0_33 = arith.constant 0 : index
    %c0_34 = arith.constant 0 : index
    %49 = vector.load %arg4[%c0_33, %c0_34] : memref<256x128xf32, #tpu.memory_space<vmem>>, vector<256x128xf32>
    %cst_35 = arith.constant dense<0.000000e+00> : vector<4x128xf32>
    %50 = tpu.matmul %48, %49, %cst_35 {dimension_numbers = #tpu.dot_dimension_numbers<[1], [0], [0], [1], [0, 0, 1, 1], [], []>} : vector<4x256xf32>, vector<256x128xf32>, vector<4x128xf32> -> vector<4x128xf32>
    %c1_36 = arith.constant 1 : index
    %c0_37 = arith.constant 0 : index
    %51 = vector.load %arg18[%c1_36, %c0_37] : memref<5x256xf32, #tpu.memory_space<vmem>>, vector<4x256xf32>
    %c0_38 = arith.constant 0 : index
    %c0_39 = arith.constant 0 : index
    %52 = vector.load %arg5[%c0_38, %c0_39] : memref<256x128xf32, #tpu.memory_space<vmem>>, vector<256x128xf32>
    %cst_40 = arith.constant dense<0.000000e+00> : vector<4x128xf32>
    %53 = tpu.matmul %51, %52, %cst_40 {dimension_numbers = #tpu.dot_dimension_numbers<[1], [0], [0], [1], [0, 0, 1, 1], [], []>} : vector<4x256xf32>, vector<256x128xf32>, vector<4x128xf32> -> vector<4x128xf32>
    %54 = arith.addf %50, %53 : vector<4x128xf32>
    %c0_41 = arith.constant 0 : index
    %c0_42 = arith.constant 0 : index
    %55 = vector.load %arg14[%c0_41, %c0_42] : memref<3x128xf32, #tpu.memory_space<vmem>>, vector<1x128xf32>
    %56 = vector.broadcast %55 : vector<1x128xf32> to vector<4x128xf32>
    %57 = arith.addf %54, %56 : vector<4x128xf32>
    %cst_43 = arith.constant 0.000000e+00 : f32
    %58 = vector.broadcast %cst_43 : f32 to vector<6x128xf32>
    %c0_44 = arith.constant 0 : index
    %c0_45 = arith.constant 0 : index
    %59 = vector.load %arg19[%c0_44, %c0_45] : memref<6x128xf32, #tpu.memory_space<vmem>>, vector<6x128xf32>
    tpu.vector_store %arg19[%c0_44, %c0_45], %58 {strides = array<i32>} : memref<6x128xf32, #tpu.memory_space<vmem>>, vector<6x128xf32>,
    %c0_46 = arith.constant 0 : index
    %c0_47 = arith.constant 0 : index
    %60 = vector.load %arg11[%c0_46, %c0_47] : memref<128x128xf32, #tpu.memory_space<vmem>>, vector<128x128xf32>
    %cst_48 = arith.constant dense<0.000000e+00> : vector<4x128xf32>
    %61 = tpu.matmul %57, %60, %cst_48 {dimension_numbers = #tpu.dot_dimension_numbers<[1], [0], [0], [1], [0, 0, 1, 1], [], []>} : vector<4x128xf32>, vector<128x128xf32>, vector<4x128xf32> -> vector<4x128xf32>
    %62 = arith.mulf %57, %57 : vector<4x128xf32>
    %c0_49 = arith.constant 0 : index
    %c0_50 = arith.constant 0 : index
    %63 = vector.load %arg11[%c0_49, %c0_50] : memref<128x128xf32, #tpu.memory_space<vmem>>, vector<128x128xf32>
    %cst_51 = arith.constant dense<0.000000e+00> : vector<4x128xf32>
    %64 = tpu.matmul %62, %63, %cst_51 {dimension_numbers = #tpu.dot_dimension_numbers<[1], [0], [0], [1], [0, 0, 1, 1], [], []>} : vector<4x128xf32>, vector<128x128xf32>, vector<4x128xf32> -> vector<4x128xf32>
    %65 = arith.mulf %61, %61 : vector<4x128xf32>
    %66 = arith.subf %64, %65 : vector<4x128xf32>
    %cst_52 = arith.constant 0.000000e+00 : f32
    %67 = vector.broadcast %cst_52 : f32 to vector<4x128xf32>
    %68 = arith.maximumf %66, %67 : vector<4x128xf32>
    %69 = arith.subf %57, %61 : vector<4x128xf32>
    %cst_53 = arith.constant 9.99999997E-7 : f32
    %70 = vector.broadcast %cst_53 : f32 to vector<4x128xf32>
    %71 = arith.addf %68, %70 : vector<4x128xf32>
    %72 = math.rsqrt %71 : vector<4x128xf32>
    %73 = arith.mulf %69, %72 : vector<4x128xf32>
    %c1_54 = arith.constant 1 : index
    %c0_55 = arith.constant 0 : index
    %74 = vector.load %arg14[%c1_54, %c0_55] : memref<3x128xf32, #tpu.memory_space<vmem>>, vector<1x128xf32>
    %75 = vector.broadcast %74 : vector<1x128xf32> to vector<4x128xf32>
    %76 = arith.mulf %73, %75 : vector<4x128xf32>
    %c2_56 = arith.constant 2 : index
    %c0_57 = arith.constant 0 : index
    %77 = vector.load %arg14[%c2_56, %c0_57] : memref<3x128xf32, #tpu.memory_space<vmem>>, vector<1x128xf32>
    %78 = vector.broadcast %77 : vector<1x128xf32> to vector<4x128xf32>
    %79 = arith.addf %76, %78 : vector<4x128xf32>
    %cst_58 = arith.constant 5.000000e-01 : f32
    %80 = vector.broadcast %cst_58 : f32 to vector<4x128xf32>
    %81 = arith.mulf %80, %79 : vector<4x128xf32>
    %cst_59 = arith.constant 4.471500e-02 : f32
    %82 = vector.broadcast %cst_59 : f32 to vector<4x128xf32>
    %83 = arith.mulf %82, %79 : vector<4x128xf32>
    %84 = arith.mulf %83, %79 : vector<4x128xf32>
    %85 = arith.mulf %84, %79 : vector<4x128xf32>
    %86 = arith.addf %79, %85 : vector<4x128xf32>
    %cst_60 = arith.constant 0.797884583 : f32
    %87 = vector.broadcast %cst_60 : f32 to vector<4x128xf32>
    %88 = arith.mulf %87, %86 : vector<4x128xf32>
    %89 = math.tanh %88 : vector<4x128xf32>
    %cst_61 = arith.constant 1.000000e+00 : f32
    %90 = vector.broadcast %cst_61 : f32 to vector<4x128xf32>
    %91 = arith.addf %90, %89 : vector<4x128xf32>
    %92 = arith.mulf %81, %91 : vector<4x128xf32>
    %c1_62 = arith.constant 1 : index
    %c0_63 = arith.constant 0 : index
    %93 = vector.load %arg19[%c1_62, %c0_63] : memref<6x128xf32, #tpu.memory_space<vmem>>, vector<4x128xf32>
    tpu.vector_store %arg19[%c1_62, %c0_63], %92 {strides = array<i32>} : memref<6x128xf32, #tpu.memory_space<vmem>>, vector<4x128xf32>,
    %c0_64 = arith.constant 0 : index
    %c0_65 = arith.constant 0 : index
    %94 = vector.load %arg19[%c0_64, %c0_65] : memref<6x128xf32, #tpu.memory_space<vmem>>, vector<4x128xf32>
    %c0_66 = arith.constant 0 : index
    %c0_67 = arith.constant 0 : index
    %95 = vector.load %arg6[%c0_66, %c0_67] : memref<128x256xf32, #tpu.memory_space<vmem>>, vector<128x256xf32>
    %cst_68 = arith.constant dense<0.000000e+00> : vector<4x256xf32>
    %96 = tpu.matmul %94, %95, %cst_68 {dimension_numbers = #tpu.dot_dimension_numbers<[1], [0], [0], [1], [0, 0, 1, 1], [], []>} : vector<4x128xf32>, vector<128x256xf32>, vector<4x256xf32> -> vector<4x256xf32>
    %c1_69 = arith.constant 1 : index
    %c0_70 = arith.constant 0 : index
    %97 = vector.load %arg19[%c1_69, %c0_70] : memref<6x128xf32, #tpu.memory_space<vmem>>, vector<4x128xf32>
    %c0_71 = arith.constant 0 : index
    %c0_72 = arith.constant 0 : index
    %98 = vector.load %arg7[%c0_71, %c0_72] : memref<128x256xf32, #tpu.memory_space<vmem>>, vector<128x256xf32>
    %cst_73 = arith.constant dense<0.000000e+00> : vector<4x256xf32>
    %99 = tpu.matmul %97, %98, %cst_73 {dimension_numbers = #tpu.dot_dimension_numbers<[1], [0], [0], [1], [0, 0, 1, 1], [], []>} : vector<4x128xf32>, vector<128x256xf32>, vector<4x256xf32> -> vector<4x256xf32>
    %100 = arith.addf %96, %99 : vector<4x256xf32>
    %c2_74 = arith.constant 2 : index
    %c0_75 = arith.constant 0 : index
    %101 = vector.load %arg19[%c2_74, %c0_75] : memref<6x128xf32, #tpu.memory_space<vmem>>, vector<4x128xf32>
    %c0_76 = arith.constant 0 : index
    %c0_77 = arith.constant 0 : index
    %102 = vector.load %arg8[%c0_76, %c0_77] : memref<128x256xf32, #tpu.memory_space<vmem>>, vector<128x256xf32>
    %cst_78 = arith.constant dense<0.000000e+00> : vector<4x256xf32>
    %103 = tpu.matmul %101, %102, %cst_78 {dimension_numbers = #tpu.dot_dimension_numbers<[1], [0], [0], [1], [0, 0, 1, 1], [], []>} : vector<4x128xf32>, vector<128x256xf32>, vector<4x256xf32> -> vector<4x256xf32>
    %104 = arith.addf %100, %103 : vector<4x256xf32>
    %c0_79 = arith.constant 0 : index
    %c0_80 = arith.constant 0 : index
    %105 = vector.load %arg15[%c0_79, %c0_80] : memref<3x256xf32, #tpu.memory_space<vmem>>, vector<1x256xf32>
    %106 = vector.broadcast %105 : vector<1x256xf32> to vector<4x256xf32>
    %107 = arith.addf %104, %106 : vector<4x256xf32>
    %c0_81 = arith.constant 0 : index
    %c0_82 = arith.constant 0 : index
    %108 = vector.load %arg12[%c0_81, %c0_82] : memref<256x256xf32, #tpu.memory_space<vmem>>, vector<256x256xf32>
    %cst_83 = arith.constant dense<0.000000e+00> : vector<4x256xf32>
    %109 = tpu.matmul %107, %108, %cst_83 {dimension_numbers = #tpu.dot_dimension_numbers<[1], [0], [0], [1], [0, 0, 1, 1], [], []>} : vector<4x256xf32>, vector<256x256xf32>, vector<4x256xf32> -> vector<4x256xf32>
    %110 = arith.mulf %107, %107 : vector<4x256xf32>
    %c0_84 = arith.constant 0 : index
    %c0_85 = arith.constant 0 : index
    %111 = vector.load %arg12[%c0_84, %c0_85] : memref<256x256xf32, #tpu.memory_space<vmem>>, vector<256x256xf32>
    %cst_86 = arith.constant dense<0.000000e+00> : vector<4x256xf32>
    %112 = tpu.matmul %110, %111, %cst_86 {dimension_numbers = #tpu.dot_dimension_numbers<[1], [0], [0], [1], [0, 0, 1, 1], [], []>} : vector<4x256xf32>, vector<256x256xf32>, vector<4x256xf32> -> vector<4x256xf32>
    %113 = arith.mulf %109, %109 : vector<4x256xf32>
    %114 = arith.subf %112, %113 : vector<4x256xf32>
    %cst_87 = arith.constant 0.000000e+00 : f32
    %115 = vector.broadcast %cst_87 : f32 to vector<4x256xf32>
    %116 = arith.maximumf %114, %115 : vector<4x256xf32>
    %117 = arith.subf %107, %109 : vector<4x256xf32>
    %cst_88 = arith.constant 9.99999997E-7 : f32
    %118 = vector.broadcast %cst_88 : f32 to vector<4x256xf32>
    %119 = arith.addf %116, %118 : vector<4x256xf32>
    %120 = math.rsqrt %119 : vector<4x256xf32>
    %121 = arith.mulf %117, %120 : vector<4x256xf32>
    %c1_89 = arith.constant 1 : index
    %c0_90 = arith.constant 0 : index
    %122 = vector.load %arg15[%c1_89, %c0_90] : memref<3x256xf32, #tpu.memory_space<vmem>>, vector<1x256xf32>
    %123 = vector.broadcast %122 : vector<1x256xf32> to vector<4x256xf32>
    %124 = arith.mulf %121, %123 : vector<4x256xf32>
    %c2_91 = arith.constant 2 : index
    %c0_92 = arith.constant 0 : index
    %125 = vector.load %arg15[%c2_91, %c0_92] : memref<3x256xf32, #tpu.memory_space<vmem>>, vector<1x256xf32>
    %126 = vector.broadcast %125 : vector<1x256xf32> to vector<4x256xf32>
    %127 = arith.addf %124, %126 : vector<4x256xf32>
    %cst_93 = arith.constant 5.000000e-01 : f32
    %128 = vector.broadcast %cst_93 : f32 to vector<4x256xf32>
    %129 = arith.mulf %128, %127 : vector<4x256xf32>
    %cst_94 = arith.constant 4.471500e-02 : f32
    %130 = vector.broadcast %cst_94 : f32 to vector<4x256xf32>
    %131 = arith.mulf %130, %127 : vector<4x256xf32>
    %132 = arith.mulf %131, %127 : vector<4x256xf32>
    %133 = arith.mulf %132, %127 : vector<4x256xf32>
    %134 = arith.addf %127, %133 : vector<4x256xf32>
    %cst_95 = arith.constant 0.797884583 : f32
    %135 = vector.broadcast %cst_95 : f32 to vector<4x256xf32>
    %136 = arith.mulf %135, %134 : vector<4x256xf32>
    %137 = math.tanh %136 : vector<4x256xf32>
    %cst_96 = arith.constant 1.000000e+00 : f32
    %138 = vector.broadcast %cst_96 : f32 to vector<4x256xf32>
    %139 = arith.addf %138, %137 : vector<4x256xf32>
    %140 = arith.mulf %129, %139 : vector<4x256xf32>
    %c0_97 = arith.constant 0 : index
    %c0_98 = arith.constant 0 : index
    %141 = vector.load %arg9[%c0_97, %c0_98] : memref<256x256xf32, #tpu.memory_space<vmem>>, vector<256x256xf32>
    %cst_99 = arith.constant dense<0.000000e+00> : vector<4x256xf32>
    %142 = tpu.matmul %140, %141, %cst_99 {dimension_numbers = #tpu.dot_dimension_numbers<[1], [0], [0], [1], [0, 0, 1, 1], [], []>} : vector<4x256xf32>, vector<256x256xf32>, vector<4x256xf32> -> vector<4x256xf32>
    %c0_100 = arith.constant 0 : index
    %c0_101 = arith.constant 0 : index
    %143 = vector.load %arg16[%c0_100, %c0_101] : memref<1x256xf32, #tpu.memory_space<vmem>>, vector<1x256xf32>
    %144 = vector.broadcast %143 : vector<1x256xf32> to vector<4x256xf32>
    %145 = arith.addf %142, %144 : vector<4x256xf32>
    %c0_102 = arith.constant 0 : index
    %c0_103 = arith.constant 0 : index
    %c0_104 = arith.constant 0 : index
    %146 = vector.load %arg17[%c0_102, %c0_103, %c0_104] : memref<1x4x256xf32, #tpu.memory_space<vmem>>, vector<1x4x256xf32>
    %147 = vector.shape_cast %146 : vector<1x4x256xf32> to vector<4x256xf32>
    %148 = vector.shape_cast %145 : vector<4x256xf32> to vector<1x4x256xf32>
    tpu.vector_store %arg17[%c0_102, %c0_103, %c0_104], %148 {strides = array<i32>} : memref<1x4x256xf32, #tpu.memory_space<vmem>>, vector<1x4x256xf32>,
    return
  }
  func.func @transform_0(%arg0: i32) -> (i32, i32, i32) {
    %c0_i32 = arith.constant 0 : i32
    %c0_i32_0 = arith.constant 0 : i32
    %c0_i32_1 = arith.constant 0 : i32
    return %arg0, %c0_i32, %c0_i32_0 : i32, i32, i32
  }
  func.func @transform_1(%arg0: i32) -> (i32, i32) {
    %c0_i32 = arith.constant 0 : i32
    %c0_i32_0 = arith.constant 0 : i32
    %c0_i32_1 = arith.constant 0 : i32
    return %c0_i32, %c0_i32_0 : i32, i32
  }
  func.func @transform_2(%arg0: i32) -> (i32, i32) {
    %c0_i32 = arith.constant 0 : i32
    %c0_i32_0 = arith.constant 0 : i32
    %c0_i32_1 = arith.constant 0 : i32
    return %c0_i32, %c0_i32_0 : i32, i32
  }
  func.func @transform_3(%arg0: i32) -> (i32, i32) {
    %c0_i32 = arith.constant 0 : i32
    %c0_i32_0 = arith.constant 0 : i32
    %c0_i32_1 = arith.constant 0 : i32
    return %c0_i32, %c0_i32_0 : i32, i32
  }
  func.func @transform_4(%arg0: i32) -> (i32, i32) {
    %c0_i32 = arith.constant 0 : i32
    %c0_i32_0 = arith.constant 0 : i32
    %c0_i32_1 = arith.constant 0 : i32
    return %c0_i32, %c0_i32_0 : i32, i32
  }
  func.func @transform_5(%arg0: i32) -> (i32, i32) {
    %c0_i32 = arith.constant 0 : i32
    %c0_i32_0 = arith.constant 0 : i32
    %c0_i32_1 = arith.constant 0 : i32
    return %c0_i32, %c0_i32_0 : i32, i32
  }
  func.func @transform_6(%arg0: i32) -> (i32, i32) {
    %c0_i32 = arith.constant 0 : i32
    %c0_i32_0 = arith.constant 0 : i32
    %c0_i32_1 = arith.constant 0 : i32
    return %c0_i32, %c0_i32_0 : i32, i32
  }
  func.func @transform_7(%arg0: i32) -> (i32, i32) {
    %c0_i32 = arith.constant 0 : i32
    %c0_i32_0 = arith.constant 0 : i32
    %c0_i32_1 = arith.constant 0 : i32
    return %c0_i32, %c0_i32_0 : i32, i32
  }
  func.func @transform_8(%arg0: i32) -> (i32, i32) {
    %c0_i32 = arith.constant 0 : i32
    %c0_i32_0 = arith.constant 0 : i32
    %c0_i32_1 = arith.constant 0 : i32
    return %c0_i32, %c0_i32_0 : i32, i32
  }
  func.func @transform_9(%arg0: i32) -> (i32, i32) {
    %c0_i32 = arith.constant 0 : i32
    %c0_i32_0 = arith.constant 0 : i32
    %c0_i32_1 = arith.constant 0 : i32
    return %c0_i32, %c0_i32_0 : i32, i32
  }
  func.func @transform_10(%arg0: i32) -> (i32, i32) {
    %c0_i32 = arith.constant 0 : i32
    %c0_i32_0 = arith.constant 0 : i32
    %c0_i32_1 = arith.constant 0 : i32
    return %c0_i32, %c0_i32_0 : i32, i32
  }
  func.func @transform_11(%arg0: i32) -> (i32, i32) {
    %c0_i32 = arith.constant 0 : i32
    %c0_i32_0 = arith.constant 0 : i32
    %c0_i32_1 = arith.constant 0 : i32
    return %c0_i32, %c0_i32_0 : i32, i32
  }
  func.func @transform_12(%arg0: i32) -> (i32, i32) {
    %c0_i32 = arith.constant 0 : i32
    %c0_i32_0 = arith.constant 0 : i32
    %c0_i32_1 = arith.constant 0 : i32
    return %c0_i32, %c0_i32_0 : i32, i32
  }
  func.func @transform_13(%arg0: i32) -> (i32, i32) {
    %c0_i32 = arith.constant 0 : i32
    %c0_i32_0 = arith.constant 0 : i32
    %c0_i32_1 = arith.constant 0 : i32
    return %c0_i32, %c0_i32_0 : i32, i32
  }
  func.func @transform_14(%arg0: i32) -> (i32, i32) {
    %c0_i32 = arith.constant 0 : i32
    %c0_i32_0 = arith.constant 0 : i32
    %c0_i32_1 = arith.constant 0 : i32
    return %c0_i32, %c0_i32_0 : i32, i32
  }
  func.func @transform_15(%arg0: i32) -> (i32, i32) {
    %c0_i32 = arith.constant 0 : i32
    %c0_i32_0 = arith.constant 0 : i32
    %c0_i32_1 = arith.constant 0 : i32
    return %c0_i32, %c0_i32_0 : i32, i32
  }
  func.func @transform_16(%arg0: i32) -> (i32, i32, i32) {
    %c0_i32 = arith.constant 0 : i32
    %c0_i32_0 = arith.constant 0 : i32
    %c0_i32_1 = arith.constant 0 : i32
    return %arg0, %c0_i32, %c0_i32_0 : i32, i32, i32
  }
}

</mosaic_0001>

<llo_original>
// kernel: tile.53
$region0: #{tile.53}
  #allocation0 [shape = 's32[1]{0}', space=sflag, size = 0x4, scoped, tag = 'scoped memory for tile.53']
  %s0 = inlined_call_operand.vmem [shape: f32[16], index: 0, kind: input, shape index: {}]
  %s1 = inlined_call_operand.vmem [shape: f32[16,16], index: 1, kind: output, shape index: {}]
  // Predicated region
  $region2: #{tile.53} parent=0 // pred_check
    _
  $region3: #{tile.53} parent=0 // pred_check_branch
    %3 = sbr.rel (0) target = $region5
  $region4: #{tile.53} parent=0 // pred_region
    _
  $region5: #{tile.53} parent=0 // pred_fallthru
    _
  %v4 = vld [vmem:[%s0] ss:$0 sm:$0xff]
  %5 = vst [vmem:[%s1] sm:$0xff] %v4
  %s6 = scalar_lea.vmem %s1, 8
  %7 = vst [vmem:[%s6] sm:$0xff] %v4

// kernel: tile.62
$region0: #{tile.62}
  %s0 = inlined_call_operand.vmem [shape: f32[16,16], index: 0, kind: input, shape index: {}]
  %s1 = inlined_call_operand.vmem [shape: f32[1,256], index: 1, kind: output, shape index: {}]
  $region1: #{tile.62} parent=0
    #allocation0 [shape = 'u8[8192]{0}', space=vmem, size = 0x2000, scoped, tag = 'scoped mem for output reshape']
    %s2 = smov 3
    %v3 = vld [vmem:[%s0] ss:$8 sm:%s2]
    %vm4 = vcmask 130048
    %5 = vst.msk [vmem:[#allocation0] ss:$8 sm:$0x3] %vm4, %v3
    %s6 = scalar_lea.vmem %s0, 7
    %s7 = smov 3
    %v8 = vld [vmem:[%s6] ss:$8 sm:%s7]
    %9 = vrot.lane.b32.xlu0 %v8, 112
    %v10 = vpop.permute.xlu0 %9
    %vm11 = vcmask 1048448
    %12 = vst.msk [vmem:[#allocation0] ss:$8 sm:$0x3] %vm11, %v10
    %s13 = scalar_lea.vmem %s0, 6
    %s14 = smov 3
    %v15 = vld [vmem:[%s13] ss:$8 sm:%s14]
    %16 = vrot.lane.b32.xlu0 %v15, 96
    %v17 = vpop.permute.xlu0 %16
    %vm18 = vcmask 917248
    %19 = vst.msk [vmem:[#allocation0] ss:$8 sm:$0x3] %vm18, %v17
    %s20 = scalar_lea.vmem %s0, 5
    %s21 = smov 3
    %v22 = vld [vmem:[%s20] ss:$8 sm:%s21]
    %23 = vrot.lane.b32.xlu0 %v22, 80
    %v24 = vpop.permute.xlu0 %23
    %vm25 = vcmask 786048
    %26 = vst.msk [vmem:[#allocation0] ss:$8 sm:$0x3] %vm25, %v24
    %s27 = scalar_lea.vmem %s0, 4
    %s28 = smov 3
    %v29 = vld [vmem:[%s27] ss:$8 sm:%s28]
    %30 = vrot.lane.b32.xlu0 %v29, 64
    %v31 = vpop.permute.xlu0 %30
    %vm32 = vcmask 654848
    %33 = vst.msk [vmem:[#allocation0] ss:$8 sm:$0x3] %vm32, %v31
    %s34 = scalar_lea.vmem %s0, 3
    %s35 = smov 3
    %v36 = vld [vmem:[%s34] ss:$8 sm:%s35]
    %37 = vrot.lane.b32.xlu0 %v36, 48
    %v38 = vpop.permute.xlu0 %37
    %vm39 = vcmask 523648
    %40 = vst.msk [vmem:[#allocation0] ss:$8 sm:$0x3] %vm39, %v38
    %s41 = scalar_lea.vmem %s0, 2
    %s42 = smov 3
    %v43 = vld [vmem:[%s41] ss:$8 sm:%s42]
    %44 = vrot.lane.b32.xlu0 %v43, 32
    %v45 = vpop.permute.xlu0 %44
    %vm46 = vcmask 392448
    %47 = vst.msk [vmem:[#allocation0] ss:$8 sm:$0x3] %vm46, %v45
    %s48 = scalar_lea.vmem %s0, 1
    %s49 = smov 3
    %v50 = vld [vmem:[%s48] ss:$8 sm:%s49]
    %51 = vrot.lane.b32.xlu0 %v50, 16
    %v52 = vpop.permute.xlu0 %51
    %vm53 = vcmask 261248
    %54 = vst.msk [vmem:[#allocation0] ss:$8 sm:$0x3] %vm53, %v52
    %s56 = ssub.s32 2, 1
    %v57 = vld [vmem:[#allocation0] sm:%s56]
    %s59 = ssub.s32 2, 1
    %60 = vst [vmem:[%s1] sm:%s59] %v57
    %s61 = scalar_lea.vmem [#allocation0], 8
    %v62 = vld [vmem:[%s61] sm:%s56]
    %s64 = ssub.s32 2, 1
    %s65 = scalar_lea.vmem %s1, 1
    %66 = vst [vmem:[%s65] sm:%s64] %v62

// kernel: tile.83
$region0: #{tile.83}
  #allocation0 [shape = 's32[1]{0}', space=sflag, size = 0x4, scoped, tag = 'scoped memory for tile.83']
  %s0 = inlined_call_operand.vmem [shape: f32[64], index: 0, kind: input, shape index: {}]
  %s1 = inlined_call_operand.vmem [shape: f32[4,64], index: 1, kind: output, shape index: {}]
  // Predicated region
  $region2: #{tile.83} parent=0 // pred_check
    _
  $region3: #{tile.83} parent=0 // pred_check_branch
    %3 = sbr.rel (0) target = $region5
  $region4: #{tile.83} parent=0 // pred_region
    _
  $region5: #{tile.83} parent=0 // pred_fallthru
    _
  %v4 = vld [vmem:[%s0] ss:$0 sm:$0xff]
  %5 = vst [vmem:[%s1] sm:$0xf] %v4

// kernel: tile.92
$region0: #{tile.92}
  %s0 = inlined_call_operand.vmem [shape: f32[4,64], index: 0, kind: input, shape index: {}]
  %s1 = inlined_call_operand.vmem [shape: f32[1,256], index: 1, kind: output, shape index: {}]
  $region1: #{tile.92} parent=0
    #allocation0 [shape = 'u8[8192]{0}', space=vmem, size = 0x2000, scoped, tag = 'scoped mem for output reshape']
    #allocation1 [shape = 'u8[4096]{0}', space=vmem, size = 0x1000, scoped, tag = 'scoped mem for input reshape']
    %s3 = ssub.s32 16, 1
    %v4 = vld [vmem:[%s0] sm:%s3]
    %5 = vst [vmem:[#allocation1] sm:%s3] %v4
    %s6 = smov 3
    %v7 = vld [vmem:[#allocation1] ss:$2 sm:%s6]
    %vm8 = vcmask 523264
    %9 = vst.msk [vmem:[#allocation0] ss:$8 sm:$0x3] %vm8, %v7
    %s10 = scalar_lea.vmem [#allocation1], 1
    %s11 = smov 3
    %v12 = vld [vmem:[%s10] ss:$2 sm:%s11]
    %13 = vrot.lane.b32.xlu0 %v12, 64
    %v14 = vpop.permute.xlu0 %13
    %vm15 = vcmask 1048064
    %16 = vst.msk [vmem:[#allocation0] ss:$8 sm:$0x3] %vm15, %v14
    %s18 = ssub.s32 2, 1
    %v19 = vld [vmem:[#allocation0] sm:%s18]
    %s21 = ssub.s32 2, 1
    %22 = vst [vmem:[%s1] sm:%s21] %v19
    %s23 = scalar_lea.vmem [#allocation0], 8
    %v24 = vld [vmem:[%s23] sm:%s18]
    %s26 = ssub.s32 2, 1
    %s27 = scalar_lea.vmem %s1, 1
    %28 = vst [vmem:[%s27] sm:%s26] %v24

// kernel: tile.68
$region0: #{tile.68}
  #allocation0 [shape = 's32[1]{0}', space=sflag, size = 0x4, scoped, tag = 'scoped memory for tile.68']
  %s0 = inlined_call_operand.vmem [shape: f32[32], index: 0, kind: input, shape index: {}]
  %s1 = inlined_call_operand.vmem [shape: f32[4,32], index: 1, kind: output, shape index: {}]
  // Predicated region
  $region2: #{tile.68} parent=0 // pred_check
    _
  $region3: #{tile.68} parent=0 // pred_check_branch
    %3 = sbr.rel (0) target = $region5
  $region4: #{tile.68} parent=0 // pred_region
    _
  $region5: #{tile.68} parent=0 // pred_fallthru
    _
  %v4 = vld [vmem:[%s0] ss:$0 sm:$0xff]
  %5 = vst [vmem:[%s1] sm:$0xf] %v4

// kernel: tile.77
$region0: #{tile.77}
  %s0 = inlined_call_operand.vmem [shape: f32[4,32], index: 0, kind: input, shape index: {}]
  %s1 = inlined_call_operand.vmem [shape: f32[1,128], index: 1, kind: output, shape index: {}]
  $region1: #{tile.77} parent=0
    #allocation0 [shape = 'u8[4096]{0}', space=vmem, size = 0x1000, scoped, tag = 'scoped mem for output reshape']
    #allocation1 [shape = 'u8[4096]{0}', space=vmem, size = 0x1000, scoped, tag = 'scoped mem for input reshape']
    %s3 = ssub.s32 16, 1
    %v4 = vld [vmem:[%s0] sm:%s3]
    %5 = vst [vmem:[#allocation1] sm:%s3] %v4
    %v6 = vld [vmem:[#allocation1] sm:$0x1]
    %vm7 = vcmask 261120
    %8 = vst.msk [vmem:[#allocation0] sm:$0x1] %vm7, %v6
    %s9 = scalar_lea.vmem [#allocation1], 3
    %v10 = vld [vmem:[%s9] sm:$0x1]
    %11 = vrot.lane.b32.xlu0 %v10, 96
    %v12 = vpop.permute.xlu0 %11
    %vm13 = vcmask 1048320
    %14 = vst.msk [vmem:[#allocation0] sm:$0x1] %vm13, %v12
    %s15 = scalar_lea.vmem [#allocation1], 2
    %v16 = vld [vmem:[%s15] sm:$0x1]
    %17 = vrot.lane.b32.xlu0 %v16, 64
    %v18 = vpop.permute.xlu0 %17
    %vm19 = vcmask 785920
    %20 = vst.msk [vmem:[#allocation0] sm:$0x1] %vm19, %v18
    %s21 = scalar_lea.vmem [#allocation1], 1
    %v22 = vld [vmem:[%s21] sm:$0x1]
    %23 = vrot.lane.b32.xlu0 %v22, 32
    %v24 = vpop.permute.xlu0 %23
    %vm25 = vcmask 523520
    %26 = vst.msk [vmem:[#allocation0] sm:$0x1] %vm25, %v24
    %s28 = ssub.s32 2, 1
    %v29 = vld [vmem:[#allocation0] sm:%s28]
    %s31 = ssub.s32 2, 1
    %32 = vst [vmem:[%s1] sm:%s31] %v29

// kernel: mask_downsampler_forward.1
$region0: #{mask_downsampler_forward.1}
  #allocation0 [shape = 'u32[]', space=smem, size = 0x4, offset = 0x4, fixed_abs, tag = 'smem constant byte address 0x4 - core index']
  #allocation1 [shape = 'u32[72,128]{1,0:T(1,128)}', space=vmem, size = 0x9000, scoped, tag = 'internal scratch']
  #allocation2 [shape = 'f32[5,256]{1,0:T(8,128)}', space=vmem, size = 0x2000, scoped, tag = 'scratch operand']
  #allocation3 [shape = 'f32[6,128]{1,0:T(8,128)}', space=vmem, size = 0x1000, scoped, tag = 'scratch operand']
  %s0 = inlined_call_operand.vmem [shape: f32[2,6,64], index: 0, kind: input, shape index: {}]
  %s1 = inlined_call_operand.vmem [shape: f32[64,256], index: 1, kind: input, shape index: {}]
  %s2 = inlined_call_operand.vmem [shape: f32[64,256], index: 2, kind: input, shape index: {}]
  %s3 = inlined_call_operand.vmem [shape: f32[256,128], index: 3, kind: input, shape index: {}]
  %s4 = inlined_call_operand.vmem [shape: f32[256,128], index: 4, kind: input, shape index: {}]
  %s5 = inlined_call_operand.vmem [shape: f32[128,256], index: 5, kind: input, shape index: {}]
  %s6 = inlined_call_operand.vmem [shape: f32[128,256], index: 6, kind: input, shape index: {}]
  %s7 = inlined_call_operand.vmem [shape: f32[128,256], index: 7, kind: input, shape index: {}]
  %s8 = inlined_call_operand.vmem [shape: f32[256,256], index: 8, kind: input, shape index: {}]
  %s9 = inlined_call_operand.vmem [shape: f32[256,256], index: 9, kind: input, shape index: {}]
  %s10 = inlined_call_operand.vmem [shape: f32[128,128], index: 10, kind: input, shape index: {}]
  %s11 = inlined_call_operand.vmem [shape: f32[256,256], index: 11, kind: input, shape index: {}]
  %s12 = inlined_call_operand.vmem [shape: f32[3,256], index: 12, kind: input, shape index: {}]
  %s13 = inlined_call_operand.vmem [shape: f32[3,128], index: 13, kind: input, shape index: {}]
  %s14 = inlined_call_operand.vmem [shape: f32[3,256], index: 14, kind: input, shape index: {}]
  %s15 = inlined_call_operand.vmem [shape: f32[1,256], index: 15, kind: input, shape index: {}]
  %s16 = inlined_call_operand.vmem [shape: f32[2,4,256], index: 16, kind: output, shape index: {}]
  %s17 = sld [smem:[#allocation0]]
  $region97: #{mask_downsampler_forward.1} parent=0
    _
  %s19 = ssub.s32 1, %s17
  %s20 = scalar_select 0, %s19, %s17
  loop: start=0, step=1, limit=4
  $region2: #{mask_downsampler_forward.1} parent=0 // loop_pre_header
    _
  $region3: #{mask_downsampler_forward.1} parent=0 // loop_header
    %s22 = sphi 0, %s26
    %p23 = scmp.ge.s32.totalorder %s22, 4
    %s32 = sphi 0, %s34
    %s35 = sphi 0, %s32
    %s36 = sphi 0, %s35
    %s52 = sphi 0, %s36
    %s56 = sphi 0, %s56
    %s58 = sphi 0, %s56
    %s59 = sphi 0, %s58
    %s73 = sphi 0, %s59
    %s77 = sphi 0, %s77
    %s79 = sphi 0, %s77
    %s80 = sphi 0, %s79
    %s94 = sphi 0, %s80
    %s98 = sphi 0, %s98
    %s100 = sphi 0, %s98
    %s101 = sphi 0, %s100
    %s115 = sphi 0, %s101
    %s119 = sphi 0, %s119
    %s121 = sphi 0, %s119
    %s122 = sphi 0, %s121
    %s136 = sphi 0, %s122
    %s140 = sphi 0, %s140
    %s142 = sphi 0, %s140
    %s143 = sphi 0, %s142
    %s157 = sphi 0, %s143
    %s161 = sphi 0, %s161
    %s163 = sphi 0, %s161
    %s164 = sphi 0, %s163
    %s178 = sphi 0, %s164
    %s182 = sphi 0, %s182
    %s184 = sphi 0, %s182
    %s185 = sphi 0, %s184
    %s199 = sphi 0, %s185
    %s203 = sphi 0, %s203
    %s205 = sphi 0, %s203
    %s206 = sphi 0, %s205
    %s220 = sphi 0, %s206
    %s224 = sphi 0, %s224
    %s226 = sphi 0, %s224
    %s227 = sphi 0, %s226
    %s241 = sphi 0, %s227
    %s245 = sphi 0, %s245
    %s247 = sphi 0, %s245
    %s248 = sphi 0, %s247
    %s262 = sphi 0, %s248
    %s266 = sphi 0, %s266
    %s268 = sphi 0, %s266
    %s269 = sphi 0, %s268
    %s283 = sphi 0, %s269
    %s287 = sphi 0, %s287
    %s289 = sphi 0, %s287
    %s290 = sphi 0, %s289
    %s304 = sphi 0, %s290
    %s308 = sphi 0, %s308
    %s310 = sphi 0, %s308
    %s311 = sphi 0, %s310
    %s325 = sphi 0, %s311
    %s329 = sphi 0, %s329
    %s331 = sphi 0, %s329
    %s332 = sphi 0, %s331
    %s346 = sphi 0, %s332
    %s350 = sphi 0, %s350
    %s352 = sphi 0, %s350
    %s353 = sphi 0, %s352
    %s367 = sphi 0, %s353
    %s373 = sphi 0, %s375
    %s376 = sphi 0, %s373
    %s377 = sphi 0, %s376
    %s393 = sphi 0, %s377
  $region4: #{mask_downsampler_forward.1} parent=0 // loop_header_branch
    %25 = sbr.rel (%p23) target = $region8
  $region5: #{mask_downsampler_forward.1} parent=0 // loop_body
    %s27 = ssub.s32 %s22, 1
    %s28 = ssub.s32 %s22, 2
    %s29 = sadd.s32 %s22, 1
    %s30 = ssub.s32 %s22, %s29
    %p31 = scmp.eq.s32.totalorder %s30, 0
    %s33 = sadd.s32 %s32, 1
    %s34 = scalar_select %p31, %s32, %s33
    %p37 = pneg %p31
    %p38 = scmp.eq.s32.totalorder %s22, 1
    %p39 = por %p37, %p38
    %p40 = scmp.ne.s32.totalorder %s32, %s35
    %p41 = scmp.eq.s32.totalorder %s22, 0
    %p42 = por %p40, %p41
    %p43 = scmp.ne.s32.totalorder %s32, %s35
    %p44 = scmp.eq.s32.totalorder %s27, 1
    %p45 = por %p43, %p44
    %p46 = scmp.ne.s32.totalorder %s35, %s36
    %p47 = scmp.eq.s32.totalorder %s27, 0
    %p48 = por %p46, %p47
    %p49 = scmp.ne.s32.totalorder %s35, %s36
    %p50 = scmp.eq.s32.totalorder %s28, 1
    %p51 = por %p49, %p50
    %p53 = scmp.ne.s32.totalorder %s36, %s52
    %p54 = scmp.eq.s32.totalorder %s28, 0
    %p55 = por %p53, %p54
    %s57 = sadd.s32 %s56, 1
    %p60 = scmp.eq.s32.totalorder %s22, 1
    %p61 = scmp.ne.s32.totalorder %s56, %s58
    %p62 = scmp.eq.s32.totalorder %s22, 0
    %p63 = por %p61, %p62
    %p64 = scmp.ne.s32.totalorder %s56, %s58
    %p65 = scmp.eq.s32.totalorder %s27, 1
    %p66 = por %p64, %p65
    %p67 = scmp.ne.s32.totalorder %s58, %s59
    %p68 = scmp.eq.s32.totalorder %s27, 0
    %p69 = por %p67, %p68
    %p70 = scmp.ne.s32.totalorder %s58, %s59
    %p71 = scmp.eq.s32.totalorder %s28, 1
    %p72 = por %p70, %p71
    %p74 = scmp.ne.s32.totalorder %s59, %s73
    %p75 = scmp.eq.s32.totalorder %s28, 0
    %p76 = por %p74, %p75
    %s78 = sadd.s32 %s77, 1
    %p81 = scmp.eq.s32.totalorder %s22, 1
    %p82 = scmp.ne.s32.totalorder %s77, %s79
    %p83 = scmp.eq.s32.totalorder %s22, 0
    %p84 = por %p82, %p83
    %p85 = scmp.ne.s32.totalorder %s77, %s79
    %p86 = scmp.eq.s32.totalorder %s27, 1
    %p87 = por %p85, %p86
    %p88 = scmp.ne.s32.totalorder %s79, %s80
    %p89 = scmp.eq.s32.totalorder %s27, 0
    %p90 = por %p88, %p89
    %p91 = scmp.ne.s32.totalorder %s79, %s80
    %p92 = scmp.eq.s32.totalorder %s28, 1
    %p93 = por %p91, %p92
    %p95 = scmp.ne.s32.totalorder %s80, %s94
    %p96 = scmp.eq.s32.totalorder %s28, 0
    %p97 = por %p95, %p96
    %s99 = sadd.s32 %s98, 1
    %p102 = scmp.eq.s32.totalorder %s22, 1
    %p103 = scmp.ne.s32.totalorder %s98, %s100
    %p104 = scmp.eq.s32.totalorder %s22, 0
    %p105 = por %p103, %p104
    %p106 = scmp.ne.s32.totalorder %s98, %s100
    %p107 = scmp.eq.s32.totalorder %s27, 1
    %p108 = por %p106, %p107
    %p109 = scmp.ne.s32.totalorder %s100, %s101
    %p110 = scmp.eq.s32.totalorder %s27, 0
    %p111 = por %p109, %p110
    %p112 = scmp.ne.s32.totalorder %s100, %s101
    %p113 = scmp.eq.s32.totalorder %s28, 1
    %p114 = por %p112, %p113
    %p116 = scmp.ne.s32.totalorder %s101, %s115
    %p117 = scmp.eq.s32.totalorder %s28, 0
    %p118 = por %p116, %p117
    %s120 = sadd.s32 %s119, 1
    %p123 = scmp.eq.s32.totalorder %s22, 1
    %p124 = scmp.ne.s32.totalorder %s119, %s121
    %p125 = scmp.eq.s32.totalorder %s22, 0
    %p126 = por %p124, %p125
    %p127 = scmp.ne.s32.totalorder %s119, %s121
    %p128 = scmp.eq.s32.totalorder %s27, 1
    %p129 = por %p127, %p128
    %p130 = scmp.ne.s32.totalorder %s121, %s122
    %p131 = scmp.eq.s32.totalorder %s27, 0
    %p132 = por %p130, %p131
    %p133 = scmp.ne.s32.totalorder %s121, %s122
    %p134 = scmp.eq.s32.totalorder %s28, 1
    %p135 = por %p133, %p134
    %p137 = scmp.ne.s32.totalorder %s122, %s136
    %p138 = scmp.eq.s32.totalorder %s28, 0
    %p139 = por %p137, %p138
    %s141 = sadd.s32 %s140, 1
    %p144 = scmp.eq.s32.totalorder %s22, 1
    %p145 = scmp.ne.s32.totalorder %s140, %s142
    %p146 = scmp.eq.s32.totalorder %s22, 0
    %p147 = por %p145, %p146
    %p148 = scmp.ne.s32.totalorder %s140, %s142
    %p149 = scmp.eq.s32.totalorder %s27, 1
    %p150 = por %p148, %p149
    %p151 = scmp.ne.s32.totalorder %s142, %s143
    %p152 = scmp.eq.s32.totalorder %s27, 0
    %p153 = por %p151, %p152
    %p154 = scmp.ne.s32.totalorder %s142, %s143
    %p155 = scmp.eq.s32.totalorder %s28, 1
    %p156 = por %p154, %p155
    %p158 = scmp.ne.s32.totalorder %s143, %s157
    %p159 = scmp.eq.s32.totalorder %s28, 0
    %p160 = por %p158, %p159
    %s162 = sadd.s32 %s161, 1
    %p165 = scmp.eq.s32.totalorder %s22, 1
    %p166 = scmp.ne.s32.totalorder %s161, %s163
    %p167 = scmp.eq.s32.totalorder %s22, 0
    %p168 = por %p166, %p167
    %p169 = scmp.ne.s32.totalorder %s161, %s163
    %p170 = scmp.eq.s32.totalorder %s27, 1
    %p171 = por %p169, %p170
    %p172 = scmp.ne.s32.totalorder %s163, %s164
    %p173 = scmp.eq.s32.totalorder %s27, 0
    %p174 = por %p172, %p173
    %p175 = scmp.ne.s32.totalorder %s163, %s164
    %p176 = scmp.eq.s32.totalorder %s28, 1
    %p177 = por %p175, %p176
    %p179 = scmp.ne.s32.totalorder %s164, %s178
    %p180 = scmp.eq.s32.totalorder %s28, 0
    %p181 = por %p179, %p180
    %s183 = sadd.s32 %s182, 1
    %p186 = scmp.eq.s32.totalorder %s22, 1
    %p187 = scmp.ne.s32.totalorder %s182, %s184
    %p188 = scmp.eq.s32.totalorder %s22, 0
    %p189 = por %p187, %p188
    %p190 = scmp.ne.s32.totalorder %s182, %s184
    %p191 = scmp.eq.s32.totalorder %s27, 1
    %p192 = por %p190, %p191
    %p193 = scmp.ne.s32.totalorder %s184, %s185
    %p194 = scmp.eq.s32.totalorder %s27, 0
    %p195 = por %p193, %p194
    %p196 = scmp.ne.s32.totalorder %s184, %s185
    %p197 = scmp.eq.s32.totalorder %s28, 1
    %p198 = por %p196, %p197
    %p200 = scmp.ne.s32.totalorder %s185, %s199
    %p201 = scmp.eq.s32.totalorder %s28, 0
    %p202 = por %p200, %p201
    %s204 = sadd.s32 %s203, 1
    %p207 = scmp.eq.s32.totalorder %s22, 1
    %p208 = scmp.ne.s32.totalorder %s203, %s205
    %p209 = scmp.eq.s32.totalorder %s22, 0
    %p210 = por %p208, %p209
    %p211 = scmp.ne.s32.totalorder %s203, %s205
    %p212 = scmp.eq.s32.totalorder %s27, 1
    %p213 = por %p211, %p212
    %p214 = scmp.ne.s32.totalorder %s205, %s206
    %p215 = scmp.eq.s32.totalorder %s27, 0
    %p216 = por %p214, %p215
    %p217 = scmp.ne.s32.totalorder %s205, %s206
    %p218 = scmp.eq.s32.totalorder %s28, 1
    %p219 = por %p217, %p218
    %p221 = scmp.ne.s32.totalorder %s206, %s220
    %p222 = scmp.eq.s32.totalorder %s28, 0
    %p223 = por %p221, %p222
    %s225 = sadd.s32 %s224, 1
    %p228 = scmp.eq.s32.totalorder %s22, 1
    %p229 = scmp.ne.s32.totalorder %s224, %s226
    %p230 = scmp.eq.s32.totalorder %s22, 0
    %p231 = por %p229, %p230
    %p232 = scmp.ne.s32.totalorder %s224, %s226
    %p233 = scmp.eq.s32.totalorder %s27, 1
    %p234 = por %p232, %p233
    %p235 = scmp.ne.s32.totalorder %s226, %s227
    %p236 = scmp.eq.s32.totalorder %s27, 0
    %p237 = por %p235, %p236
    %p238 = scmp.ne.s32.totalorder %s226, %s227
    %p239 = scmp.eq.s32.totalorder %s28, 1
    %p240 = por %p238, %p239
    %p242 = scmp.ne.s32.totalorder %s227, %s241
    %p243 = scmp.eq.s32.totalorder %s28, 0
    %p244 = por %p242, %p243
    %s246 = sadd.s32 %s245, 1
    %p249 = scmp.eq.s32.totalorder %s22, 1
    %p250 = scmp.ne.s32.totalorder %s245, %s247
    %p251 = scmp.eq.s32.totalorder %s22, 0
    %p252 = por %p250, %p251
    %p253 = scmp.ne.s32.totalorder %s245, %s247
    %p254 = scmp.eq.s32.totalorder %s27, 1
    %p255 = por %p253, %p254
    %p256 = scmp.ne.s32.totalorder %s247, %s248
    %p257 = scmp.eq.s32.totalorder %s27, 0
    %p258 = por %p256, %p257
    %p259 = scmp.ne.s32.totalorder %s247, %s248
    %p260 = scmp.eq.s32.totalorder %s28, 1
    %p261 = por %p259, %p260
    %p263 = scmp.ne.s32.totalorder %s248, %s262
    %p264 = scmp.eq.s32.totalorder %s28, 0
    %p265 = por %p263, %p264
    %s267 = sadd.s32 %s266, 1
    %p270 = scmp.eq.s32.totalorder %s22, 1
    %p271 = scmp.ne.s32.totalorder %s266, %s268
    %p272 = scmp.eq.s32.totalorder %s22, 0
    %p273 = por %p271, %p272
    %p274 = scmp.ne.s32.totalorder %s266, %s268
    %p275 = scmp.eq.s32.totalorder %s27, 1
    %p276 = por %p274, %p275
    %p277 = scmp.ne.s32.totalorder %s268, %s269
    %p278 = scmp.eq.s32.totalorder %s27, 0
    %p279 = por %p277, %p278
    %p280 = scmp.ne.s32.totalorder %s268, %s269
    %p281 = scmp.eq.s32.totalorder %s28, 1
    %p282 = por %p280, %p281
    %p284 = scmp.ne.s32.totalorder %s269, %s283
    %p285 = scmp.eq.s32.totalorder %s28, 0
    %p286 = por %p284, %p285
    %s288 = sadd.s32 %s287, 1
    %p291 = scmp.eq.s32.totalorder %s22, 1
    %p292 = scmp.ne.s32.totalorder %s287, %s289
    %p293 = scmp.eq.s32.totalorder %s22, 0
    %p294 = por %p292, %p293
    %p295 = scmp.ne.s32.totalorder %s287, %s289
    %p296 = scmp.eq.s32.totalorder %s27, 1
    %p297 = por %p295, %p296
    %p298 = scmp.ne.s32.totalorder %s289, %s290
    %p299 = scmp.eq.s32.totalorder %s27, 0
    %p300 = por %p298, %p299
    %p301 = scmp.ne.s32.totalorder %s289, %s290
    %p302 = scmp.eq.s32.totalorder %s28, 1
    %p303 = por %p301, %p302
    %p305 = scmp.ne.s32.totalorder %s290, %s304
    %p306 = scmp.eq.s32.totalorder %s28, 0
    %p307 = por %p305, %p306
    %s309 = sadd.s32 %s308, 1
    %p312 = scmp.eq.s32.totalorder %s22, 1
    %p313 = scmp.ne.s32.totalorder %s308, %s310
    %p314 = scmp.eq.s32.totalorder %s22, 0
    %p315 = por %p313, %p314
    %p316 = scmp.ne.s32.totalorder %s308, %s310
    %p317 = scmp.eq.s32.totalorder %s27, 1
    %p318 = por %p316, %p317
    %p319 = scmp.ne.s32.totalorder %s310, %s311
    %p320 = scmp.eq.s32.totalorder %s27, 0
    %p321 = por %p319, %p320
    %p322 = scmp.ne.s32.totalorder %s310, %s311
    %p323 = scmp.eq.s32.totalorder %s28, 1
    %p324 = por %p322, %p323
    %p326 = scmp.ne.s32.totalorder %s311, %s325
    %p327 = scmp.eq.s32.totalorder %s28, 0
    %p328 = por %p326, %p327
    %s330 = sadd.s32 %s329, 1
    %p333 = scmp.eq.s32.totalorder %s22, 1
    %p334 = scmp.ne.s32.totalorder %s329, %s331
    %p335 = scmp.eq.s32.totalorder %s22, 0
    %p336 = por %p334, %p335
    %p337 = scmp.ne.s32.totalorder %s329, %s331
    %p338 = scmp.eq.s32.totalorder %s27, 1
    %p339 = por %p337, %p338
    %p340 = scmp.ne.s32.totalorder %s331, %s332
    %p341 = scmp.eq.s32.totalorder %s27, 0
    %p342 = por %p340, %p341
    %p343 = scmp.ne.s32.totalorder %s331, %s332
    %p344 = scmp.eq.s32.totalorder %s28, 1
    %p345 = por %p343, %p344
    %p347 = scmp.ne.s32.totalorder %s332, %s346
    %p348 = scmp.eq.s32.totalorder %s28, 0
    %p349 = por %p347, %p348
    %s351 = sadd.s32 %s350, 1
    %p354 = scmp.eq.s32.totalorder %s22, 1
    %p355 = scmp.ne.s32.totalorder %s350, %s352
    %p356 = scmp.eq.s32.totalorder %s22, 0
    %p357 = por %p355, %p356
    %p358 = scmp.ne.s32.totalorder %s350, %s352
    %p359 = scmp.eq.s32.totalorder %s27, 1
    %p360 = por %p358, %p359
    %p361 = scmp.ne.s32.totalorder %s352, %s353
    %p362 = scmp.eq.s32.totalorder %s27, 0
    %p363 = por %p361, %p362
    %p364 = scmp.ne.s32.totalorder %s352, %s353
    %p365 = scmp.eq.s32.totalorder %s28, 1
    %p366 = por %p364, %p365
    %p368 = scmp.ne.s32.totalorder %s353, %s367
    %p369 = scmp.eq.s32.totalorder %s28, 0
    %p370 = por %p368, %p369
    %s371 = ssub.s32 %s22, %s29
    %p372 = scmp.eq.s32.totalorder %s371, 0
    %s374 = sadd.s32 %s373, 1
    %s375 = scalar_select %p372, %s373, %s374
    %p378 = pneg %p372
    %p379 = scmp.eq.s32.totalorder %s22, 1
    %p380 = por %p378, %p379
    %p381 = scmp.ne.s32.totalorder %s373, %s376
    %p382 = scmp.eq.s32.totalorder %s22, 0
    %p383 = por %p381, %p382
    %p384 = scmp.ne.s32.totalorder %s373, %s376
    %p385 = scmp.eq.s32.totalorder %s27, 1
    %p386 = por %p384, %p385
    %p387 = scmp.ne.s32.totalorder %s376, %s377
    %p388 = scmp.eq.s32.totalorder %s27, 0
    %p389 = por %p387, %p388
    %p390 = scmp.ne.s32.totalorder %s376, %s377
    %p391 = scmp.eq.s32.totalorder %s28, 1
    %p392 = por %p390, %p391
    %p394 = scmp.ne.s32.totalorder %s377, %s393
    %p395 = scmp.eq.s32.totalorder %s28, 0
    %p396 = por %p394, %p395
    %p397 = scmp.le.s32.totalorder 1, %s22
    %p398 = scmp.lt.s32.totalorder %s22, 3
    %p399 = pnand %p397, %p398
    %p400 = pneg %p399
    // Predicated region
    $region9: #{mask_downsampler_forward.1} parent=5 // pred_check
      _
    $region10: #{mask_downsampler_forward.1} parent=5 // pred_check_branch
      %402 = sbr.rel (%p399) target = $region12
    $region11: #{mask_downsampler_forward.1} parent=5 // pred_region
      %s403 = ssub.s32 %s22, 1
      // Predicated region
      $region13: #{mask_downsampler_forward.1} parent=11 // pred_check
        %p404 = pneg %p69
      $region14: #{mask_downsampler_forward.1} parent=11 // pred_check_branch
        %406 = sbr.rel (%p404) target = $region16
      $region15: #{mask_downsampler_forward.1} parent=11 // pred_region
        _
      $region16: #{mask_downsampler_forward.1} parent=11 // pred_fallthru
        _
      // Predicated region
      $region17: #{mask_downsampler_forward.1} parent=11 // pred_check
        %p407 = pneg %p90
      $region18: #{mask_downsampler_forward.1} parent=11 // pred_check_branch
        %409 = sbr.rel (%p407) target = $region20
      $region19: #{mask_downsampler_forward.1} parent=11 // pred_region
        _
      $region20: #{mask_downsampler_forward.1} parent=11 // pred_fallthru
        _
      // Predicated region
      $region21: #{mask_downsampler_forward.1} parent=11 // pred_check
        %p410 = pneg %p111
      $region22: #{mask_downsampler_forward.1} parent=11 // pred_check_branch
        %412 = sbr.rel (%p410) target = $region24
      $region23: #{mask_downsampler_forward.1} parent=11 // pred_region
        _
      $region24: #{mask_downsampler_forward.1} parent=11 // pred_fallthru
        _
      // Predicated region
      $region25: #{mask_downsampler_forward.1} parent=11 // pred_check
        %p413 = pneg %p132
      $region26: #{mask_downsampler_forward.1} parent=11 // pred_check_branch
        %415 = sbr.rel (%p413) target = $region28
      $region27: #{mask_downsampler_forward.1} parent=11 // pred_region
        _
      $region28: #{mask_downsampler_forward.1} parent=11 // pred_fallthru
        _
      // Predicated region
      $region29: #{mask_downsampler_forward.1} parent=11 // pred_check
        %p416 = pneg %p153
      $region30: #{mask_downsampler_forward.1} parent=11 // pred_check_branch
        %418 = sbr.rel (%p416) target = $region32
      $region31: #{mask_downsampler_forward.1} parent=11 // pred_region
        _
      $region32: #{mask_downsampler_forward.1} parent=11 // pred_fallthru
        _
      // Predicated region
      $region33: #{mask_downsampler_forward.1} parent=11 // pred_check
        %p419 = pneg %p174
      $region34: #{mask_downsampler_forward.1} parent=11 // pred_check_branch
        %421 = sbr.rel (%p419) target = $region36
      $region35: #{mask_downsampler_forward.1} parent=11 // pred_region
        _
      $region36: #{mask_downsampler_forward.1} parent=11 // pred_fallthru
        _
      // Predicated region
      $region37: #{mask_downsampler_forward.1} parent=11 // pred_check
        %p422 = pneg %p195
      $region38: #{mask_downsampler_forward.1} parent=11 // pred_check_branch
        %424 = sbr.rel (%p422) target = $region40
      $region39: #{mask_downsampler_forward.1} parent=11 // pred_region
        _
      $region40: #{mask_downsampler_forward.1} parent=11 // pred_fallthru
        _
      // Predicated region
      $region41: #{mask_downsampler_forward.1} parent=11 // pred_check
        %p425 = pneg %p216
      $region42: #{mask_downsampler_forward.1} parent=11 // pred_check_branch
        %427 = sbr.rel (%p425) target = $region44
      $region43: #{mask_downsampler_forward.1} parent=11 // pred_region
        _
      $region44: #{mask_downsampler_forward.1} parent=11 // pred_fallthru
        _
      // Predicated region
      $region45: #{mask_downsampler_forward.1} parent=11 // pred_check
        %p428 = pneg %p237
      $region46: #{mask_downsampler_forward.1} parent=11 // pred_check_branch
        %430 = sbr.rel (%p428) target = $region48
      $region47: #{mask_downsampler_forward.1} parent=11 // pred_region
        _
      $region48: #{mask_downsampler_forward.1} parent=11 // pred_fallthru
        _
      // Predicated region
      $region49: #{mask_downsampler_forward.1} parent=11 // pred_check
        %p431 = pneg %p258
      $region50: #{mask_downsampler_forward.1} parent=11 // pred_check_branch
        %433 = sbr.rel (%p431) target = $region52
      $region51: #{mask_downsampler_forward.1} parent=11 // pred_region
        _
      $region52: #{mask_downsampler_forward.1} parent=11 // pred_fallthru
        _
      // Predicated region
      $region53: #{mask_downsampler_forward.1} parent=11 // pred_check
        %p434 = pneg %p279
      $region54: #{mask_downsampler_forward.1} parent=11 // pred_check_branch
        %436 = sbr.rel (%p434) target = $region56
      $region55: #{mask_downsampler_forward.1} parent=11 // pred_region
        _
      $region56: #{mask_downsampler_forward.1} parent=11 // pred_fallthru
        _
      // Predicated region
      $region57: #{mask_downsampler_forward.1} parent=11 // pred_check
        %p437 = pneg %p300
      $region58: #{mask_downsampler_forward.1} parent=11 // pred_check_branch
        %439 = sbr.rel (%p437) target = $region60
      $region59: #{mask_downsampler_forward.1} parent=11 // pred_region
        _
      $region60: #{mask_downsampler_forward.1} parent=11 // pred_fallthru
        _
      // Predicated region
      $region61: #{mask_downsampler_forward.1} parent=11 // pred_check
        %p440 = pneg %p321
      $region62: #{mask_downsampler_forward.1} parent=11 // pred_check_branch
        %442 = sbr.rel (%p440) target = $region64
      $region63: #{mask_downsampler_forward.1} parent=11 // pred_region
        _
      $region64: #{mask_downsampler_forward.1} parent=11 // pred_fallthru
        _
      // Predicated region
      $region65: #{mask_downsampler_forward.1} parent=11 // pred_check
        %p443 = pneg %p342
      $region66: #{mask_downsampler_forward.1} parent=11 // pred_check_branch
        %445 = sbr.rel (%p443) target = $region68
      $region67: #{mask_downsampler_forward.1} parent=11 // pred_region
        _
      $region68: #{mask_downsampler_forward.1} parent=11 // pred_fallthru
        _
      // Predicated region
      $region69: #{mask_downsampler_forward.1} parent=11 // pred_check
        %p446 = pneg %p363
      $region70: #{mask_downsampler_forward.1} parent=11 // pred_check_branch
        %448 = sbr.rel (%p446) target = $region72
      $region71: #{mask_downsampler_forward.1} parent=11 // pred_region
        _
      $region72: #{mask_downsampler_forward.1} parent=11 // pred_fallthru
        _
    $region12: #{mask_downsampler_forward.1} parent=5 // pred_fallthru
      _
    %p449 = scmp.lt.s32.totalorder %s22, 2
    // Predicated region
    $region73: #{mask_downsampler_forward.1} parent=5 // pred_check
      %p450 = pneg %p449
    $region74: #{mask_downsampler_forward.1} parent=5 // pred_check_branch
      %452 = sbr.rel (%p450) target = $region76
    $region75: #{mask_downsampler_forward.1} parent=5 // pred_region
      // Predicated region
      $region77: #{mask_downsampler_forward.1} parent=75 // pred_check
        %p453 = pneg %p42
      $region78: #{mask_downsampler_forward.1} parent=75 // pred_check_branch
        %455 = sbr.rel (%p453) target = $region80
      $region79: #{mask_downsampler_forward.1} parent=75 // pred_region
        %p456 = scmp.lt.s32.totalorder %s22, 1
        %s457 = scalar_select %p456, %s22, 1
        %s458 = smul.addr %s457, 8
        %s459 = scalar_lea.vmem %s0, %s458
      $region80: #{mask_downsampler_forward.1} parent=75 // pred_fallthru
        _
    $region76: #{mask_downsampler_forward.1} parent=5 // pred_fallthru
      _
    %p460 = scmp.le.s32.totalorder 1, %s22
    %p461 = scmp.lt.s32.totalorder %s22, 3
    %p462 = pnand %p460, %p461
    %p463 = pneg %p462
    // Predicated region
    $region81: #{mask_downsampler_forward.1} parent=5 // pred_check
      _
    $region82: #{mask_downsampler_forward.1} parent=5 // pred_check_branch
      %465 = sbr.rel (%p462) target = $region84
    $region83: #{mask_downsampler_forward.1} parent=5 // pred_region
      %s466 = ssub.s32 %s22, 1
      %p467 = scmp.lt.s32.totalorder %s27, 1
      %s468 = scalar_select %p467, %s27, 1
      %s469 = smul.addr %s468, 8
      %s470 = scalar_lea.vmem %s0, %s469
      %p471 = pneg %p48
      %p472 = pneg %p45
      %p473 = pneg %p69
      %p474 = pneg %p66
      %p475 = pneg %p90
      %p476 = pneg %p87
      %p477 = pneg %p111
      %p478 = pneg %p108
      %p479 = pneg %p132
      %p480 = pneg %p129
      %p481 = pneg %p153
      %p482 = pneg %p150
      %p483 = pneg %p174
      %p484 = pneg %p171
      %p485 = pneg %p195
      %p486 = pneg %p192
      %p487 = pneg %p216
      %p488 = pneg %p213
      %p489 = pneg %p237
      %p490 = pneg %p234
      %p491 = pneg %p258
      %p492 = pneg %p255
      %p493 = pneg %p279
      %p494 = pneg %p276
      %p495 = pneg %p300
      %p496 = pneg %p297
      %p497 = pneg %p321
      %p498 = pneg %p318
      %p499 = pneg %p342
      %p500 = pneg %p339
      %p501 = pneg %p363
      %p502 = pneg %p360
      %p503 = pneg %p389
      %p504 = pneg %p386
      %p505 = scmp.lt.s32.totalorder %s27, 1
      %s506 = scalar_select %p505, %s27, 1
      %s507 = smul.addr %s506, 2
      %s508 = smul.addr %s507, 4
      %s509 = scalar_lea.vmem %s16, %s508
      %p510 = scmp.lt.s32.totalorder %s27, 1
      %s511 = scalar_select %p510, %s27, 1
      %s512 = smul.addr %s511, 8
      %s513 = scalar_lea.vmem %s0, %s512
      %p514 = scmp.lt.s32.totalorder %s27, 1
      %s515 = scalar_select %p514, %s27, 1
      %s516 = smul.addr %s515, 2
      %s517 = smul.addr %s516, 4
      %s518 = scalar_lea.vmem %s16, %s517
      %v519 = vld [vmem:[%s513] sm:$0x1f]
      %v520 = vld [vmem:[%s513 + $0x1] sm:$0x1f]
      %v521 = vld [vmem:[%s1] sm:$0xff]
      %v522 = vld [vmem:[%s1 + $0x8] sm:$0xff]
      %v523 = vld [vmem:[%s1 + $0x10] sm:$0xff]
      %v524 = vld [vmem:[%s1 + $0x18] sm:$0xff]
      %v525 = vld [vmem:[%s1 + $0x20] sm:$0xff]
      %v526 = vld [vmem:[%s1 + $0x28] sm:$0xff]
      %v527 = vld [vmem:[%s1 + $0x30] sm:$0xff]
      %v528 = vld [vmem:[%s1 + $0x38] sm:$0xff]
      %v529 = vld [vmem:[%s1 + $0x40] sm:$0xff]
      %v530 = vld [vmem:[%s1 + $0x48] sm:$0xff]
      %v531 = vld [vmem:[%s1 + $0x50] sm:$0xff]
      %v532 = vld [vmem:[%s1 + $0x58] sm:$0xff]
      %v533 = vld [vmem:[%s1 + $0x60] sm:$0xff]
      %v534 = vld [vmem:[%s1 + $0x68] sm:$0xff]
      %v535 = vld [vmem:[%s1 + $0x70] sm:$0xff]
      %v536 = vld [vmem:[%s1 + $0x78] sm:$0xff]
      %v537 = vld [vmem:[%s2] sm:$0xff]
      %v538 = vld [vmem:[%s2 + $0x8] sm:$0xff]
      %v539 = vld [vmem:[%s2 + $0x10] sm:$0xff]
      %v540 = vld [vmem:[%s2 + $0x18] sm:$0xff]
      %v541 = vld [vmem:[%s2 + $0x20] sm:$0xff]
      %v542 = vld [vmem:[%s2 + $0x28] sm:$0xff]
      %v543 = vld [vmem:[%s2 + $0x30] sm:$0xff]
      %v544 = vld [vmem:[%s2 + $0x38] sm:$0xff]
      %v545 = vld [vmem:[%s2 + $0x40] sm:$0xff]
      %v546 = vld [vmem:[%s2 + $0x48] sm:$0xff]
      %v547 = vld [vmem:[%s2 + $0x50] sm:$0xff]
      %v548 = vld [vmem:[%s2 + $0x58] sm:$0xff]
      %v549 = vld [vmem:[%s2 + $0x60] sm:$0xff]
      %v550 = vld [vmem:[%s2 + $0x68] sm:$0xff]
      %v551 = vld [vmem:[%s2 + $0x70] sm:$0xff]
      %v552 = vld [vmem:[%s2 + $0x78] sm:$0xff]
      %vm553 = vcmask 523264
      %v555 = vsel %vm553, %v520, 0
      %557 = vmatpush.msra.mxu0 0.0
      %558 = vmatpush.msra.mxu0 0.0
      %559 = vmatpush.msra.mxu0 0.0
      %560 = vmatpush.msra.mxu0 0.0
      %561 = vmatpush.msra.mxu0 0.0
      %562 = vmatpush.msra.mxu0 0.0
      %563 = vmatpush.msra.mxu0 0.0
      %564 = vmatpush.msra.mxu0 0.0
      %565 = vmatpush.msra.mxu0 %v551
      %566 = vmatpush.msra.mxu0 %v549
      %567 = vmatpush.msra.mxu0 %v547
      %568 = vmatpush.msra.mxu0 %v545
      %569 = vmatpush.msra.mxu0 %v543
      %570 = vmatpush.msra.mxu0 %v541
      %571 = vmatpush.msra.mxu0 %v539
      %572 = vmatpush.msra.mxu0 %v537
      %573 = vmatmul.f32.gmra.mxu0 %v555
      %v574 = vpop.f32.mrf.mxu0
      %v575 = vadd.f32 0.0, %v574
      %576 = vdwg.mxu0
      %577 = vmatpush.msra.mxu0 0.0
      %578 = vmatpush.msra.mxu0 0.0
      %579 = vmatpush.msra.mxu0 0.0
      %580 = vmatpush.msra.mxu0 0.0
      %581 = vmatpush.msra.mxu0 0.0
      %582 = vmatpush.msra.mxu0 0.0
      %583 = vmatpush.msra.mxu0 0.0
      %584 = vmatpush.msra.mxu0 0.0
      %585 = vmatpush.msra.mxu0 %v552
      %586 = vmatpush.msra.mxu0 %v550
      %587 = vmatpush.msra.mxu0 %v548
      %588 = vmatpush.msra.mxu0 %v546
      %589 = vmatpush.msra.mxu0 %v544
      %590 = vmatpush.msra.mxu0 %v542
      %591 = vmatpush.msra.mxu0 %v540
      %592 = vmatpush.msra.mxu0 %v538
      %593 = vmatmul.f32.gmra.mxu0 %v555
      %v594 = vpop.f32.mrf.mxu0
      %v595 = vadd.f32 0.0, %v594
      %596 = vdwg.mxu0
      %v598 = vsel %vm553, %v519, 0
      %600 = vmatpush.msra.mxu0 0.0
      %601 = vmatpush.msra.mxu0 0.0
      %602 = vmatpush.msra.mxu0 0.0
      %603 = vmatpush.msra.mxu0 0.0
      %604 = vmatpush.msra.mxu0 0.0
      %605 = vmatpush.msra.mxu0 0.0
      %606 = vmatpush.msra.mxu0 0.0
      %607 = vmatpush.msra.mxu0 0.0
      %608 = vmatpush.msra.mxu0 %v535
      %609 = vmatpush.msra.mxu0 %v533
      %610 = vmatpush.msra.mxu0 %v531
      %611 = vmatpush.msra.mxu0 %v529
      %612 = vmatpush.msra.mxu0 %v527
      %613 = vmatpush.msra.mxu0 %v525
      %614 = vmatpush.msra.mxu0 %v523
      %615 = vmatpush.msra.mxu0 %v521
      %616 = vmatmul.f32.gmra.mxu0 %v598
      %v617 = vpop.f32.mrf.mxu0
      %v618 = vadd.f32 %v575, %v617
      %619 = vdwg.mxu0
      %620 = vmatpush.msra.mxu0 0.0
      %621 = vmatpush.msra.mxu0 0.0
      %622 = vmatpush.msra.mxu0 0.0
      %623 = vmatpush.msra.mxu0 0.0
      %624 = vmatpush.msra.mxu0 0.0
      %625 = vmatpush.msra.mxu0 0.0
      %626 = vmatpush.msra.mxu0 0.0
      %627 = vmatpush.msra.mxu0 0.0
      %628 = vmatpush.msra.mxu0 %v536
      %629 = vmatpush.msra.mxu0 %v534
      %630 = vmatpush.msra.mxu0 %v532
      %631 = vmatpush.msra.mxu0 %v530
      %632 = vmatpush.msra.mxu0 %v528
      %633 = vmatpush.msra.mxu0 %v526
      %634 = vmatpush.msra.mxu0 %v524
      %635 = vmatpush.msra.mxu0 %v522
      %636 = vmatmul.f32.gmra.mxu0 %v598
      %v637 = vpop.f32.mrf.mxu0
      %v638 = vadd.f32 %v595, %v637
      %639 = vdwg.mxu0
      %v640 = vld [vmem:[%s12] ss:$4 sm:$0x3]
      %v642 = vperm.slane %v640, 0
      %v643 = vperm.slane %v640, 1
      %v646 = vadd.f32 %v618, %v642
      %v647 = vadd.f32 %v638, %v643
      %v648 = vld [vmem:[%s9] sm:$0xff]
      %v649 = vld [vmem:[%s9 + $0x8] sm:$0xff]
      %v650 = vld [vmem:[%s9 + $0x10] sm:$0xff]
      %v651 = vld [vmem:[%s9 + $0x18] sm:$0xff]
      %v652 = vld [vmem:[%s9 + $0x20] sm:$0xff]
      %v653 = vld [vmem:[%s9 + $0x28] sm:$0xff]
      %v654 = vld [vmem:[%s9 + $0x30] sm:$0xff]
      %v655 = vld [vmem:[%s9 + $0x38] sm:$0xff]
      %v656 = vld [vmem:[%s9 + $0x40] sm:$0xff]
      %v657 = vld [vmem:[%s9 + $0x48] sm:$0xff]
      %v658 = vld [vmem:[%s9 + $0x50] sm:$0xff]
      %v659 = vld [vmem:[%s9 + $0x58] sm:$0xff]
      %v660 = vld [vmem:[%s9 + $0x60] sm:$0xff]
      %v661 = vld [vmem:[%s9 + $0x68] sm:$0xff]
      %v662 = vld [vmem:[%s9 + $0x70] sm:$0xff]
      %v663 = vld [vmem:[%s9 + $0x78] sm:$0xff]
      %v664 = vld [vmem:[%s9 + $0x80] sm:$0xff]
      %v665 = vld [vmem:[%s9 + $0x88] sm:$0xff]
      %v666 = vld [vmem:[%s9 + $0x90] sm:$0xff]
      %v667 = vld [vmem:[%s9 + $0x98] sm:$0xff]
      %v668 = vld [vmem:[%s9 + $0xa0] sm:$0xff]
      %v669 = vld [vmem:[%s9 + $0xa8] sm:$0xff]
      %v670 = vld [vmem:[%s9 + $0xb0] sm:$0xff]
      %v671 = vld [vmem:[%s9 + $0xb8] sm:$0xff]
      %v672 = vld [vmem:[%s9 + $0xc0] sm:$0xff]
      %v673 = vld [vmem:[%s9 + $0xc8] sm:$0xff]
      %v674 = vld [vmem:[%s9 + $0xd0] sm:$0xff]
      %v675 = vld [vmem:[%s9 + $0xd8] sm:$0xff]
      %v676 = vld [vmem:[%s9 + $0xe0] sm:$0xff]
      %v677 = vld [vmem:[%s9 + $0xe8] sm:$0xff]
      %v678 = vld [vmem:[%s9 + $0xf0] sm:$0xff]
      %v679 = vld [vmem:[%s9 + $0xf8] sm:$0xff]
      %v680 = vld [vmem:[%s9 + $0x100] sm:$0xff]
      %v681 = vld [vmem:[%s9 + $0x108] sm:$0xff]
      %v682 = vld [vmem:[%s9 + $0x110] sm:$0xff]
      %v683 = vld [vmem:[%s9 + $0x118] sm:$0xff]
      %v684 = vld [vmem:[%s9 + $0x120] sm:$0xff]
      %v685 = vld [vmem:[%s9 + $0x128] sm:$0xff]
      %v686 = vld [vmem:[%s9 + $0x130] sm:$0xff]
      %v687 = vld [vmem:[%s9 + $0x138] sm:$0xff]
      %v688 = vld [vmem:[%s9 + $0x140] sm:$0xff]
      %v689 = vld [vmem:[%s9 + $0x148] sm:$0xff]
      %v690 = vld [vmem:[%s9 + $0x150] sm:$0xff]
      %v691 = vld [vmem:[%s9 + $0x158] sm:$0xff]
      %v692 = vld [vmem:[%s9 + $0x160] sm:$0xff]
      %v693 = vld [vmem:[%s9 + $0x168] sm:$0xff]
      %v694 = vld [vmem:[%s9 + $0x170] sm:$0xff]
      %v695 = vld [vmem:[%s9 + $0x178] sm:$0xff]
      %v696 = vld [vmem:[%s9 + $0x180] sm:$0xff]
      %v697 = vld [vmem:[%s9 + $0x188] sm:$0xff]
      %v698 = vld [vmem:[%s9 + $0x190] sm:$0xff]
      %v699 = vld [vmem:[%s9 + $0x198] sm:$0xff]
      %v700 = vld [vmem:[%s9 + $0x1a0] sm:$0xff]
      %v701 = vld [vmem:[%s9 + $0x1a8] sm:$0xff]
      %v702 = vld [vmem:[%s9 + $0x1b0] sm:$0xff]
      %v703 = vld [vmem:[%s9 + $0x1b8] sm:$0xff]
      %v704 = vld [vmem:[%s9 + $0x1c0] sm:$0xff]
      %v705 = vld [vmem:[%s9 + $0x1c8] sm:$0xff]
      %v706 = vld [vmem:[%s9 + $0x1d0] sm:$0xff]
      %v707 = vld [vmem:[%s9 + $0x1d8] sm:$0xff]
      %v708 = vld [vmem:[%s9 + $0x1e0] sm:$0xff]
      %v709 = vld [vmem:[%s9 + $0x1e8] sm:$0xff]
      %v710 = vld [vmem:[%s9 + $0x1f0] sm:$0xff]
      %v711 = vld [vmem:[%s9 + $0x1f8] sm:$0xff]
      %712 = vmatpush.msra.mxu0 %v678
      %713 = vmatpush.msra.mxu0 %v676
      %714 = vmatpush.msra.mxu0 %v674
      %715 = vmatpush.msra.mxu0 %v672
      %716 = vmatpush.msra.mxu0 %v670
      %717 = vmatpush.msra.mxu0 %v668
      %718 = vmatpush.msra.mxu0 %v666
      %719 = vmatpush.msra.mxu0 %v664
      %720 = vmatpush.msra.mxu0 %v662
      %721 = vmatpush.msra.mxu0 %v660
      %722 = vmatpush.msra.mxu0 %v658
      %723 = vmatpush.msra.mxu0 %v656
      %724 = vmatpush.msra.mxu0 %v654
      %725 = vmatpush.msra.mxu0 %v652
      %726 = vmatpush.msra.mxu0 %v650
      %727 = vmatpush.msra.mxu0 %v648
      %728 = vmatmul.f32.gmra.mxu0 %v646
      %v729 = vpop.f32.mrf.mxu0
      %v730 = vadd.f32 0.0, %v729
      %731 = vdwg.mxu0
      %732 = vmatpush.msra.mxu0 %v710
      %733 = vmatpush.msra.mxu0 %v708
      %734 = vmatpush.msra.mxu0 %v706
      %735 = vmatpush.msra.mxu0 %v704
      %736 = vmatpush.msra.mxu0 %v702
      %737 = vmatpush.msra.mxu0 %v700
      %738 = vmatpush.msra.mxu0 %v698
      %739 = vmatpush.msra.mxu0 %v696
      %740 = vmatpush.msra.mxu0 %v694
      %741 = vmatpush.msra.mxu0 %v692
      %742 = vmatpush.msra.mxu0 %v690
      %743 = vmatpush.msra.mxu0 %v688
      %744 = vmatpush.msra.mxu0 %v686
      %745 = vmatpush.msra.mxu0 %v684
      %746 = vmatpush.msra.mxu0 %v682
      %747 = vmatpush.msra.mxu0 %v680
      %748 = vmatmul.f32.gmra.mxu0 %v647
      %v749 = vpop.f32.mrf.mxu0
      %v750 = vadd.f32 %v730, %v749
      %751 = vdwg.mxu0
      %752 = vmatpush.msra.mxu0 %v679
      %753 = vmatpush.msra.mxu0 %v677
      %754 = vmatpush.msra.mxu0 %v675
      %755 = vmatpush.msra.mxu0 %v673
      %756 = vmatpush.msra.mxu0 %v671
      %757 = vmatpush.msra.mxu0 %v669
      %758 = vmatpush.msra.mxu0 %v667
      %759 = vmatpush.msra.mxu0 %v665
      %760 = vmatpush.msra.mxu0 %v663
      %761 = vmatpush.msra.mxu0 %v661
      %762 = vmatpush.msra.mxu0 %v659
      %763 = vmatpush.msra.mxu0 %v657
      %764 = vmatpush.msra.mxu0 %v655
      %765 = vmatpush.msra.mxu0 %v653
      %766 = vmatpush.msra.mxu0 %v651
      %767 = vmatpush.msra.mxu0 %v649
      %768 = vmatmul.f32.gmra.mxu0 %v646
      %v769 = vpop.f32.mrf.mxu0
      %v770 = vadd.f32 0.0, %v769
      %771 = vdwg.mxu0
      %772 = vmatpush.msra.mxu0 %v711
      %773 = vmatpush.msra.mxu0 %v709
      %774 = vmatpush.msra.mxu0 %v707
      %775 = vmatpush.msra.mxu0 %v705
      %776 = vmatpush.msra.mxu0 %v703
      %777 = vmatpush.msra.mxu0 %v701
      %778 = vmatpush.msra.mxu0 %v699
      %779 = vmatpush.msra.mxu0 %v697
      %780 = vmatpush.msra.mxu0 %v695
      %781 = vmatpush.msra.mxu0 %v693
      %782 = vmatpush.msra.mxu0 %v691
      %783 = vmatpush.msra.mxu0 %v689
      %784 = vmatpush.msra.mxu0 %v687
      %785 = vmatpush.msra.mxu0 %v685
      %786 = vmatpush.msra.mxu0 %v683
      %787 = vmatpush.msra.mxu0 %v681
      %788 = vmatmul.f32.gmra.mxu0 %v647
      %v789 = vpop.f32.mrf.mxu0
      %v790 = vadd.f32 %v770, %v789
      %791 = vdwg.mxu0
      %v792 = vmul.f32 %v646, %v646
      %v793 = vmul.f32 %v647, %v647
      %794 = vmatpush.msra.mxu0 %v678
      %795 = vmatpush.msra.mxu0 %v676
      %796 = vmatpush.msra.mxu0 %v674
      %797 = vmatpush.msra.mxu0 %v672
      %798 = vmatpush.msra.mxu0 %v670
      %799 = vmatpush.msra.mxu0 %v668
      %800 = vmatpush.msra.mxu0 %v666
      %801 = vmatpush.msra.mxu0 %v664
      %802 = vmatpush.msra.mxu0 %v662
      %803 = vmatpush.msra.mxu0 %v660
      %804 = vmatpush.msra.mxu0 %v658
      %805 = vmatpush.msra.mxu0 %v656
      %806 = vmatpush.msra.mxu0 %v654
      %807 = vmatpush.msra.mxu0 %v652
      %808 = vmatpush.msra.mxu0 %v650
      %809 = vmatpush.msra.mxu0 %v648
      %810 = vmatmul.f32.gmra.mxu0 %v792
      %v811 = vpop.f32.mrf.mxu0
      %v812 = vadd.f32 0.0, %v811
      %813 = vdwg.mxu0
      %814 = vmatpush.msra.mxu0 %v710
      %815 = vmatpush.msra.mxu0 %v708
      %816 = vmatpush.msra.mxu0 %v706
      %817 = vmatpush.msra.mxu0 %v704
      %818 = vmatpush.msra.mxu0 %v702
      %819 = vmatpush.msra.mxu0 %v700
      %820 = vmatpush.msra.mxu0 %v698
      %821 = vmatpush.msra.mxu0 %v696
      %822 = vmatpush.msra.mxu0 %v694
      %823 = vmatpush.msra.mxu0 %v692
      %824 = vmatpush.msra.mxu0 %v690
      %825 = vmatpush.msra.mxu0 %v688
      %826 = vmatpush.msra.mxu0 %v686
      %827 = vmatpush.msra.mxu0 %v684
      %828 = vmatpush.msra.mxu0 %v682
      %829 = vmatpush.msra.mxu0 %v680
      %830 = vmatmul.f32.gmra.mxu0 %v793
      %v831 = vpop.f32.mrf.mxu0
      %v832 = vadd.f32 %v812, %v831
      %833 = vdwg.mxu0
      %834 = vmatpush.msra.mxu0 %v679
      %835 = vmatpush.msra.mxu0 %v677
      %836 = vmatpush.msra.mxu0 %v675
      %837 = vmatpush.msra.mxu0 %v673
      %838 = vmatpush.msra.mxu0 %v671
      %839 = vmatpush.msra.mxu0 %v669
      %840 = vmatpush.msra.mxu0 %v667
      %841 = vmatpush.msra.mxu0 %v665
      %842 = vmatpush.msra.mxu0 %v663
      %843 = vmatpush.msra.mxu0 %v661
      %844 = vmatpush.msra.mxu0 %v659
      %845 = vmatpush.msra.mxu0 %v657
      %846 = vmatpush.msra.mxu0 %v655
      %847 = vmatpush.msra.mxu0 %v653
      %848 = vmatpush.msra.mxu0 %v651
      %849 = vmatpush.msra.mxu0 %v649
      %850 = vmatmul.f32.gmra.mxu0 %v792
      %v851 = vpop.f32.mrf.mxu0
      %v852 = vadd.f32 0.0, %v851
      %853 = vdwg.mxu0
      %854 = vmatpush.msra.mxu0 %v711
      %855 = vmatpush.msra.mxu0 %v709
      %856 = vmatpush.msra.mxu0 %v707
      %857 = vmatpush.msra.mxu0 %v705
      %858 = vmatpush.msra.mxu0 %v703
      %859 = vmatpush.msra.mxu0 %v701
      %860 = vmatpush.msra.mxu0 %v699
      %861 = vmatpush.msra.mxu0 %v697
      %862 = vmatpush.msra.mxu0 %v695
      %863 = vmatpush.msra.mxu0 %v693
      %864 = vmatpush.msra.mxu0 %v691
      %865 = vmatpush.msra.mxu0 %v689
      %866 = vmatpush.msra.mxu0 %v687
      %867 = vmatpush.msra.mxu0 %v685
      %868 = vmatpush.msra.mxu0 %v683
      %869 = vmatpush.msra.mxu0 %v681
      %870 = vmatmul.f32.gmra.mxu0 %v793
      %v871 = vpop.f32.mrf.mxu0
      %v872 = vadd.f32 %v852, %v871
      %873 = vdwg.mxu0
      %v874 = vmul.f32 %v750, %v750
      %v875 = vmul.f32 %v790, %v790
      %v876 = vsub.f32 %v832, %v874
      %v877 = vsub.f32 %v872, %v875
      %v878 = vmax.f32 %v876, 0.0
      %v879 = vmax.f32 %v877, 0.0
      %v880 = vsub.f32 %v646, %v750
      %v881 = vsub.f32 %v647, %v790
      %v882 = vadd.f32 %v878, 1e-06
      %v883 = vadd.f32 %v879, 1e-06
      %v884 = vrsqrt.pop %v882
      %v885 = vmul.f32 %v884, %v882
      %v886 = vmul.f32 %v885, %v884
      %v887 = vmul.f32 0.5, %v886
      %v888 = vsub.f32 1.5, %v887
      %v889 = vmul.f32 %v884, %v888
      %vm890 = vweird.f32 %v882
      %vm891 = vweird.f32 %v884
      %vm892 = vmor %vm890, %vm891
      %v893 = vsel %vm892, %v884, %v889
      %v894 = vrsqrt.pop %v883
      %v895 = vmul.f32 %v894, %v883
      %v896 = vmul.f32 %v895, %v894
      %v897 = vmul.f32 0.5, %v896
      %v898 = vsub.f32 1.5, %v897
      %v899 = vmul.f32 %v894, %v898
      %vm900 = vweird.f32 %v883
      %vm901 = vweird.f32 %v894
      %vm902 = vmor %vm900, %vm901
      %v903 = vsel %vm902, %v894, %v899
      %v904 = vmul.f32 %v880, %v893
      %v905 = vmul.f32 %v881, %v903
      %s906 = scalar_lea.vmem %s12, 1
      %v907 = vld [vmem:[%s906] ss:$4 sm:$0x3]
      %v909 = vperm.slane %v907, 0
      %v910 = vperm.slane %v907, 1
      %v913 = vmul.f32 %v904, %v909
      %v914 = vmul.f32 %v905, %v910
      %s915 = scalar_lea.vmem %s12, 2
      %v916 = vld [vmem:[%s915] ss:$4 sm:$0x3]
      %v918 = vperm.slane %v916, 0
      %v919 = vperm.slane %v916, 1
      %v922 = vadd.f32 %v913, %v918
      %v923 = vadd.f32 %v914, %v919
      %v924 = vmul.f32 %v922, 0.5
      %v925 = vmul.f32 %v923, 0.5
      %v926 = vmul.f32 %v922, 0.044715
      %v927 = vmul.f32 %v923, 0.044715
      %v928 = vmul.f32 %v926, %v922
      %v929 = vmul.f32 %v927, %v923
      %v930 = vmul.f32 %v928, %v922
      %v931 = vmul.f32 %v929, %v923
      %v932 = vadd.f32 %v922, %v930
      %v933 = vadd.f32 %v923, %v931
      %v934 = vmul.f32 %v932, 0.7978846
      %v935 = vmul.f32 %v933, 0.7978846
      %v936 = vtanh.pop %v934
      %v937 = vtanh.pop %v935
      %v938 = vadd.f32 %v936, 1.0
      %v939 = vadd.f32 %v937, 1.0
      %v940 = vmul.f32 %v924, %v938
      %v941 = vmul.f32 %v925, %v939
      %942 = vst [vmem:[#allocation2] sm:$0x1f] %v940
      %943 = vst [vmem:[#allocation2 + $0x8] sm:$0x1f] %v941
      %944 = vst [vmem:[#allocation2] sm:$0x1] 0.0
      %v945 = vld [vmem:[#allocation2] sm:$0xf]
      %v946 = vld [vmem:[#allocation2 + $0x8] sm:$0xf]
      %v947 = vld [vmem:[%s3] sm:$0xff]
      %v948 = vld [vmem:[%s3 + $0x8] sm:$0xff]
      %v949 = vld [vmem:[%s3 + $0x10] sm:$0xff]
      %v950 = vld [vmem:[%s3 + $0x18] sm:$0xff]
      %v951 = vld [vmem:[%s3 + $0x20] sm:$0xff]
      %v952 = vld [vmem:[%s3 + $0x28] sm:$0xff]
      %v953 = vld [vmem:[%s3 + $0x30] sm:$0xff]
      %v954 = vld [vmem:[%s3 + $0x38] sm:$0xff]
      %v955 = vld [vmem:[%s3 + $0x40] sm:$0xff]
      %v956 = vld [vmem:[%s3 + $0x48] sm:$0xff]
      %v957 = vld [vmem:[%s3 + $0x50] sm:$0xff]
      %v958 = vld [vmem:[%s3 + $0x58] sm:$0xff]
      %v959 = vld [vmem:[%s3 + $0x60] sm:$0xff]
      %v960 = vld [vmem:[%s3 + $0x68] sm:$0xff]
      %v961 = vld [vmem:[%s3 + $0x70] sm:$0xff]
      %v962 = vld [vmem:[%s3 + $0x78] sm:$0xff]
      %v963 = vld [vmem:[%s3 + $0x80] sm:$0xff]
      %v964 = vld [vmem:[%s3 + $0x88] sm:$0xff]
      %v965 = vld [vmem:[%s3 + $0x90] sm:$0xff]
      %v966 = vld [vmem:[%s3 + $0x98] sm:$0xff]
      %v967 = vld [vmem:[%s3 + $0xa0] sm:$0xff]
      %v968 = vld [vmem:[%s3 + $0xa8] sm:$0xff]
      %v969 = vld [vmem:[%s3 + $0xb0] sm:$0xff]
      %v970 = vld [vmem:[%s3 + $0xb8] sm:$0xff]
      %v971 = vld [vmem:[%s3 + $0xc0] sm:$0xff]
      %v972 = vld [vmem:[%s3 + $0xc8] sm:$0xff]
      %v973 = vld [vmem:[%s3 + $0xd0] sm:$0xff]
      %v974 = vld [vmem:[%s3 + $0xd8] sm:$0xff]
      %v975 = vld [vmem:[%s3 + $0xe0] sm:$0xff]
      %v976 = vld [vmem:[%s3 + $0xe8] sm:$0xff]
      %v977 = vld [vmem:[%s3 + $0xf0] sm:$0xff]
      %v978 = vld [vmem:[%s3 + $0xf8] sm:$0xff]
      %v979 = vld [vmem:[#allocation2] sm:$0x1e]
      %v980 = vld [vmem:[#allocation2 + $0x8] sm:$0x1e]
      %v981 = vld [vmem:[%s4] sm:$0xff]
      %v982 = vld [vmem:[%s4 + $0x8] sm:$0xff]
      %v983 = vld [vmem:[%s4 + $0x10] sm:$0xff]
      %v984 = vld [vmem:[%s4 + $0x18] sm:$0xff]
      %v985 = vld [vmem:[%s4 + $0x20] sm:$0xff]
      %v986 = vld [vmem:[%s4 + $0x28] sm:$0xff]
      %v987 = vld [vmem:[%s4 + $0x30] sm:$0xff]
      %v988 = vld [vmem:[%s4 + $0x38] sm:$0xff]
      %v989 = vld [vmem:[%s4 + $0x40] sm:$0xff]
      %v990 = vld [vmem:[%s4 + $0x48] sm:$0xff]
      %v991 = vld [vmem:[%s4 + $0x50] sm:$0xff]
      %v992 = vld [vmem:[%s4 + $0x58] sm:$0xff]
      %v993 = vld [vmem:[%s4 + $0x60] sm:$0xff]
      %v994 = vld [vmem:[%s4 + $0x68] sm:$0xff]
      %v995 = vld [vmem:[%s4 + $0x70] sm:$0xff]
      %v996 = vld [vmem:[%s4 + $0x78] sm:$0xff]
      %v997 = vld [vmem:[%s4 + $0x80] sm:$0xff]
      %v998 = vld [vmem:[%s4 + $0x88] sm:$0xff]
      %v999 = vld [vmem:[%s4 + $0x90] sm:$0xff]
      %v1000 = vld [vmem:[%s4 + $0x98] sm:$0xff]
      %v1001 = vld [vmem:[%s4 + $0xa0] sm:$0xff]
      %v1002 = vld [vmem:[%s4 + $0xa8] sm:$0xff]
      %v1003 = vld [vmem:[%s4 + $0xb0] sm:$0xff]
      %v1004 = vld [vmem:[%s4 + $0xb8] sm:$0xff]
      %v1005 = vld [vmem:[%s4 + $0xc0] sm:$0xff]
      %v1006 = vld [vmem:[%s4 + $0xc8] sm:$0xff]
      %v1007 = vld [vmem:[%s4 + $0xd0] sm:$0xff]
      %v1008 = vld [vmem:[%s4 + $0xd8] sm:$0xff]
      %v1009 = vld [vmem:[%s4 + $0xe0] sm:$0xff]
      %v1010 = vld [vmem:[%s4 + $0xe8] sm:$0xff]
      %v1011 = vld [vmem:[%s4 + $0xf0] sm:$0xff]
      %v1012 = vld [vmem:[%s4 + $0xf8] sm:$0xff]
      %v1015 = vrot.slane %v979, 1
      %v1016 = vrot.slane %v980, 1
      %1019 = vmatpush.msra.mxu0 %v996
      %1020 = vmatpush.msra.mxu0 %v995
      %1021 = vmatpush.msra.mxu0 %v994
      %1022 = vmatpush.msra.mxu0 %v993
      %1023 = vmatpush.msra.mxu0 %v992
      %1024 = vmatpush.msra.mxu0 %v991
      %1025 = vmatpush.msra.mxu0 %v990
      %1026 = vmatpush.msra.mxu0 %v989
      %1027 = vmatpush.msra.mxu0 %v988
      %1028 = vmatpush.msra.mxu0 %v987
      %1029 = vmatpush.msra.mxu0 %v986
      %1030 = vmatpush.msra.mxu0 %v985
      %1031 = vmatpush.msra.mxu0 %v984
      %1032 = vmatpush.msra.mxu0 %v983
      %1033 = vmatpush.msra.mxu0 %v982
      %1034 = vmatpush.msra.mxu0 %v981
      %1035 = vmatmul.f32.gmra.mxu0 %v1015
      %v1036 = vpop.f32.mrf.mxu0
      %v1037 = vadd.f32 0.0, %v1036
      %1038 = vdwg.mxu0
      %1039 = vmatpush.msra.mxu0 %v1012
      %1040 = vmatpush.msra.mxu0 %v1011
      %1041 = vmatpush.msra.mxu0 %v1010
      %1042 = vmatpush.msra.mxu0 %v1009
      %1043 = vmatpush.msra.mxu0 %v1008
      %1044 = vmatpush.msra.mxu0 %v1007
      %1045 = vmatpush.msra.mxu0 %v1006
      %1046 = vmatpush.msra.mxu0 %v1005
      %1047 = vmatpush.msra.mxu0 %v1004
      %1048 = vmatpush.msra.mxu0 %v1003
      %1049 = vmatpush.msra.mxu0 %v1002
      %1050 = vmatpush.msra.mxu0 %v1001
      %1051 = vmatpush.msra.mxu0 %v1000
      %1052 = vmatpush.msra.mxu0 %v999
      %1053 = vmatpush.msra.mxu0 %v998
      %1054 = vmatpush.msra.mxu0 %v997
      %1055 = vmatmul.f32.gmra.mxu0 %v1016
      %v1056 = vpop.f32.mrf.mxu0
      %v1057 = vadd.f32 %v1037, %v1056
      %1058 = vdwg.mxu0
      %1059 = vmatpush.msra.mxu0 %v962
      %1060 = vmatpush.msra.mxu0 %v961
      %1061 = vmatpush.msra.mxu0 %v960
      %1062 = vmatpush.msra.mxu0 %v959
      %1063 = vmatpush.msra.mxu0 %v958
      %1064 = vmatpush.msra.mxu0 %v957
      %1065 = vmatpush.msra.mxu0 %v956
      %1066 = vmatpush.msra.mxu0 %v955
      %1067 = vmatpush.msra.mxu0 %v954
      %1068 = vmatpush.msra.mxu0 %v953
      %1069 = vmatpush.msra.mxu0 %v952
      %1070 = vmatpush.msra.mxu0 %v951
      %1071 = vmatpush.msra.mxu0 %v950
      %1072 = vmatpush.msra.mxu0 %v949
      %1073 = vmatpush.msra.mxu0 %v948
      %1074 = vmatpush.msra.mxu0 %v947
      %1075 = vmatmul.f32.gmra.mxu0 %v945
      %v1076 = vpop.f32.mrf.mxu0
      %v1077 = vadd.f32 %v1057, %v1076
      %1078 = vdwg.mxu0
      %1079 = vmatpush.msra.mxu0 %v978
      %1080 = vmatpush.msra.mxu0 %v977
      %1081 = vmatpush.msra.mxu0 %v976
      %1082 = vmatpush.msra.mxu0 %v975
      %1083 = vmatpush.msra.mxu0 %v974
      %1084 = vmatpush.msra.mxu0 %v973
      %1085 = vmatpush.msra.mxu0 %v972
      %1086 = vmatpush.msra.mxu0 %v971
      %1087 = vmatpush.msra.mxu0 %v970
      %1088 = vmatpush.msra.mxu0 %v969
      %1089 = vmatpush.msra.mxu0 %v968
      %1090 = vmatpush.msra.mxu0 %v967
      %1091 = vmatpush.msra.mxu0 %v966
      %1092 = vmatpush.msra.mxu0 %v965
      %1093 = vmatpush.msra.mxu0 %v964
      %1094 = vmatpush.msra.mxu0 %v963
      %1095 = vmatmul.f32.gmra.mxu0 %v946
      %v1096 = vpop.f32.mrf.mxu0
      %v1097 = vadd.f32 %v1077, %v1096
      %1098 = vdwg.mxu0
      %v1099 = vld [vmem:[%s13] sm:$0x1]
      %v1100 = vperm.slane %v1099, 0
      %v1101 = vadd.f32 %v1097, %v1100
      %1102 = vst [vmem:[#allocation3] sm:$0x3f] 0.0
      %v1103 = vld [vmem:[%s10] sm:$0xff]
      %v1104 = vld [vmem:[%s10 + $0x8] sm:$0xff]
      %v1105 = vld [vmem:[%s10 + $0x10] sm:$0xff]
      %v1106 = vld [vmem:[%s10 + $0x18] sm:$0xff]
      %v1107 = vld [vmem:[%s10 + $0x20] sm:$0xff]
      %v1108 = vld [vmem:[%s10 + $0x28] sm:$0xff]
      %v1109 = vld [vmem:[%s10 + $0x30] sm:$0xff]
      %v1110 = vld [vmem:[%s10 + $0x38] sm:$0xff]
      %v1111 = vld [vmem:[%s10 + $0x40] sm:$0xff]
      %v1112 = vld [vmem:[%s10 + $0x48] sm:$0xff]
      %v1113 = vld [vmem:[%s10 + $0x50] sm:$0xff]
      %v1114 = vld [vmem:[%s10 + $0x58] sm:$0xff]
      %v1115 = vld [vmem:[%s10 + $0x60] sm:$0xff]
      %v1116 = vld [vmem:[%s10 + $0x68] sm:$0xff]
      %v1117 = vld [vmem:[%s10 + $0x70] sm:$0xff]
      %v1118 = vld [vmem:[%s10 + $0x78] sm:$0xff]
      %1119 = vmatpush.msra.mxu0 %v1118
      %1120 = vmatpush.msra.mxu0 %v1117
      %1121 = vmatpush.msra.mxu0 %v1116
      %1122 = vmatpush.msra.mxu0 %v1115
      %1123 = vmatpush.msra.mxu0 %v1114
      %1124 = vmatpush.msra.mxu0 %v1113
      %1125 = vmatpush.msra.mxu0 %v1112
      %1126 = vmatpush.msra.mxu0 %v1111
      %1127 = vmatpush.msra.mxu0 %v1110
      %1128 = vmatpush.msra.mxu0 %v1109
      %1129 = vmatpush.msra.mxu0 %v1108
      %1130 = vmatpush.msra.mxu0 %v1107
      %1131 = vmatpush.msra.mxu0 %v1106
      %1132 = vmatpush.msra.mxu0 %v1105
      %1133 = vmatpush.msra.mxu0 %v1104
      %1134 = vmatpush.msra.mxu0 %v1103
      %1135 = vmatmul.f32.gmra.mxu0 %v1101
      %v1136 = vpop.f32.mrf.mxu0
      %v1137 = vadd.f32 0.0, %v1136
      %1138 = vdwg.mxu0
      %v1139 = vmul.f32 %v1101, %v1101
      %1140 = vmatpush.msra.mxu0 %v1118
      %1141 = vmatpush.msra.mxu0 %v1117
      %1142 = vmatpush.msra.mxu0 %v1116
      %1143 = vmatpush.msra.mxu0 %v1115
      %1144 = vmatpush.msra.mxu0 %v1114
      %1145 = vmatpush.msra.mxu0 %v1113
      %1146 = vmatpush.msra.mxu0 %v1112
      %1147 = vmatpush.msra.mxu0 %v1111
      %1148 = vmatpush.msra.mxu0 %v1110
      %1149 = vmatpush.msra.mxu0 %v1109
      %1150 = vmatpush.msra.mxu0 %v1108
      %1151 = vmatpush.msra.mxu0 %v1107
      %1152 = vmatpush.msra.mxu0 %v1106
      %1153 = vmatpush.msra.mxu0 %v1105
      %1154 = vmatpush.msra.mxu0 %v1104
      %1155 = vmatpush.msra.mxu0 %v1103
      %1156 = vmatmul.f32.gmra.mxu0 %v1139
      %v1157 = vpop.f32.mrf.mxu0
      %v1158 = vadd.f32 0.0, %v1157
      %1159 = vdwg.mxu0
      %v1160 = vmul.f32 %v1137, %v1137
      %v1161 = vsub.f32 %v1158, %v1160
      %v1162 = vmax.f32 %v1161, 0.0
      %v1163 = vsub.f32 %v1101, %v1137
      %v1164 = vadd.f32 %v1162, 1e-06
      %v1165 = vrsqrt.pop %v1164
      %v1166 = vmul.f32 %v1165, %v1164
      %v1167 = vmul.f32 %v1166, %v1165
      %v1168 = vmul.f32 0.5, %v1167
      %v1169 = vsub.f32 1.5, %v1168
      %v1170 = vmul.f32 %v1165, %v1169
      %vm1171 = vweird.f32 %v1164
      %vm1172 = vweird.f32 %v1165
      %vm1173 = vmor %vm1171, %vm1172
      %v1174 = vsel %vm1173, %v1165, %v1170
      %v1175 = vmul.f32 %v1163, %v1174
      %v1176 = vld [vmem:[%s13 + $0x1] sm:$0x1]
      %v1177 = vperm.slane %v1176, 0
      %v1178 = vmul.f32 %v1175, %v1177
      %v1179 = vld [vmem:[%s13 + $0x2] sm:$0x1]
      %v1180 = vperm.slane %v1179, 0
      %v1181 = vadd.f32 %v1178, %v1180
      %v1182 = vmul.f32 %v1181, 0.5
      %v1183 = vmul.f32 %v1181, 0.044715
      %v1184 = vmul.f32 %v1183, %v1181
      %v1185 = vmul.f32 %v1184, %v1181
      %v1186 = vadd.f32 %v1181, %v1185
      %v1187 = vmul.f32 %v1186, 0.7978846
      %v1188 = vtanh.pop %v1187
      %v1189 = vadd.f32 %v1188, 1.0
      %v1190 = vmul.f32 %v1182, %v1189
      %1191 = vst [vmem:[#allocation3 + $0x1] sm:$0xf] %v1190
      %v1192 = vld [vmem:[#allocation3] sm:$0xf]
      %v1193 = vld [vmem:[%s5] sm:$0xff]
      %v1194 = vld [vmem:[%s5 + $0x8] sm:$0xff]
      %v1195 = vld [vmem:[%s5 + $0x10] sm:$0xff]
      %v1196 = vld [vmem:[%s5 + $0x18] sm:$0xff]
      %v1197 = vld [vmem:[%s5 + $0x20] sm:$0xff]
      %v1198 = vld [vmem:[%s5 + $0x28] sm:$0xff]
      %v1199 = vld [vmem:[%s5 + $0x30] sm:$0xff]
      %v1200 = vld [vmem:[%s5 + $0x38] sm:$0xff]
      %v1201 = vld [vmem:[%s5 + $0x40] sm:$0xff]
      %v1202 = vld [vmem:[%s5 + $0x48] sm:$0xff]
      %v1203 = vld [vmem:[%s5 + $0x50] sm:$0xff]
      %v1204 = vld [vmem:[%s5 + $0x58] sm:$0xff]
      %v1205 = vld [vmem:[%s5 + $0x60] sm:$0xff]
      %v1206 = vld [vmem:[%s5 + $0x68] sm:$0xff]
      %v1207 = vld [vmem:[%s5 + $0x70] sm:$0xff]
      %v1208 = vld [vmem:[%s5 + $0x78] sm:$0xff]
      %v1209 = vld [vmem:[%s5 + $0x80] sm:$0xff]
      %v1210 = vld [vmem:[%s5 + $0x88] sm:$0xff]
      %v1211 = vld [vmem:[%s5 + $0x90] sm:$0xff]
      %v1212 = vld [vmem:[%s5 + $0x98] sm:$0xff]
      %v1213 = vld [vmem:[%s5 + $0xa0] sm:$0xff]
      %v1214 = vld [vmem:[%s5 + $0xa8] sm:$0xff]
      %v1215 = vld [vmem:[%s5 + $0xb0] sm:$0xff]
      %v1216 = vld [vmem:[%s5 + $0xb8] sm:$0xff]
      %v1217 = vld [vmem:[%s5 + $0xc0] sm:$0xff]
      %v1218 = vld [vmem:[%s5 + $0xc8] sm:$0xff]
      %v1219 = vld [vmem:[%s5 + $0xd0] sm:$0xff]
      %v1220 = vld [vmem:[%s5 + $0xd8] sm:$0xff]
      %v1221 = vld [vmem:[%s5 + $0xe0] sm:$0xff]
      %v1222 = vld [vmem:[%s5 + $0xe8] sm:$0xff]
      %v1223 = vld [vmem:[%s5 + $0xf0] sm:$0xff]
      %v1224 = vld [vmem:[%s5 + $0xf8] sm:$0xff]
      %v1225 = vld [vmem:[#allocation3 + $0x1] sm:$0xf]
      %v1226 = vld [vmem:[%s6] sm:$0xff]
      %v1227 = vld [vmem:[%s6 + $0x8] sm:$0xff]
      %v1228 = vld [vmem:[%s6 + $0x10] sm:$0xff]
      %v1229 = vld [vmem:[%s6 + $0x18] sm:$0xff]
      %v1230 = vld [vmem:[%s6 + $0x20] sm:$0xff]
      %v1231 = vld [vmem:[%s6 + $0x28] sm:$0xff]
      %v1232 = vld [vmem:[%s6 + $0x30] sm:$0xff]
      %v1233 = vld [vmem:[%s6 + $0x38] sm:$0xff]
      %v1234 = vld [vmem:[%s6 + $0x40] sm:$0xff]
      %v1235 = vld [vmem:[%s6 + $0x48] sm:$0xff]
      %v1236 = vld [vmem:[%s6 + $0x50] sm:$0xff]
      %v1237 = vld [vmem:[%s6 + $0x58] sm:$0xff]
      %v1238 = vld [vmem:[%s6 + $0x60] sm:$0xff]
      %v1239 = vld [vmem:[%s6 + $0x68] sm:$0xff]
      %v1240 = vld [vmem:[%s6 + $0x70] sm:$0xff]
      %v1241 = vld [vmem:[%s6 + $0x78] sm:$0xff]
      %v1242 = vld [vmem:[%s6 + $0x80] sm:$0xff]
      %v1243 = vld [vmem:[%s6 + $0x88] sm:$0xff]
      %v1244 = vld [vmem:[%s6 + $0x90] sm:$0xff]
      %v1245 = vld [vmem:[%s6 + $0x98] sm:$0xff]
      %v1246 = vld [vmem:[%s6 + $0xa0] sm:$0xff]
      %v1247 = vld [vmem:[%s6 + $0xa8] sm:$0xff]
      %v1248 = vld [vmem:[%s6 + $0xb0] sm:$0xff]
      %v1249 = vld [vmem:[%s6 + $0xb8] sm:$0xff]
      %v1250 = vld [vmem:[%s6 + $0xc0] sm:$0xff]
      %v1251 = vld [vmem:[%s6 + $0xc8] sm:$0xff]
      %v1252 = vld [vmem:[%s6 + $0xd0] sm:$0xff]
      %v1253 = vld [vmem:[%s6 + $0xd8] sm:$0xff]
      %v1254 = vld [vmem:[%s6 + $0xe0] sm:$0xff]
      %v1255 = vld [vmem:[%s6 + $0xe8] sm:$0xff]
      %v1256 = vld [vmem:[%s6 + $0xf0] sm:$0xff]
      %v1257 = vld [vmem:[%s6 + $0xf8] sm:$0xff]
      %1258 = vmatpush.msra.mxu0 %v1256
      %1259 = vmatpush.msra.mxu0 %v1254
      %1260 = vmatpush.msra.mxu0 %v1252
      %1261 = vmatpush.msra.mxu0 %v1250
      %1262 = vmatpush.msra.mxu0 %v1248
      %1263 = vmatpush.msra.mxu0 %v1246
      %1264 = vmatpush.msra.mxu0 %v1244
      %1265 = vmatpush.msra.mxu0 %v1242
      %1266 = vmatpush.msra.mxu0 %v1240
      %1267 = vmatpush.msra.mxu0 %v1238
      %1268 = vmatpush.msra.mxu0 %v1236
      %1269 = vmatpush.msra.mxu0 %v1234
      %1270 = vmatpush.msra.mxu0 %v1232
      %1271 = vmatpush.msra.mxu0 %v1230
      %1272 = vmatpush.msra.mxu0 %v1228
      %1273 = vmatpush.msra.mxu0 %v1226
      %1274 = vmatmul.f32.gmra.mxu0 %v1225
      %v1275 = vpop.f32.mrf.mxu0
      %v1276 = vadd.f32 0.0, %v1275
      %1277 = vdwg.mxu0
      %1278 = vmatpush.msra.mxu0 %v1257
      %1279 = vmatpush.msra.mxu0 %v1255
      %1280 = vmatpush.msra.mxu0 %v1253
      %1281 = vmatpush.msra.mxu0 %v1251
      %1282 = vmatpush.msra.mxu0 %v1249
      %1283 = vmatpush.msra.mxu0 %v1247
      %1284 = vmatpush.msra.mxu0 %v1245
      %1285 = vmatpush.msra.mxu0 %v1243
      %1286 = vmatpush.msra.mxu0 %v1241
      %1287 = vmatpush.msra.mxu0 %v1239
      %1288 = vmatpush.msra.mxu0 %v1237
      %1289 = vmatpush.msra.mxu0 %v1235
      %1290 = vmatpush.msra.mxu0 %v1233
      %1291 = vmatpush.msra.mxu0 %v1231
      %1292 = vmatpush.msra.mxu0 %v1229
      %1293 = vmatpush.msra.mxu0 %v1227
      %1294 = vmatmul.f32.gmra.mxu0 %v1225
      %v1295 = vpop.f32.mrf.mxu0
      %v1296 = vadd.f32 0.0, %v1295
      %1297 = vdwg.mxu0
      %1298 = vmatpush.msra.mxu0 %v1223
      %1299 = vmatpush.msra.mxu0 %v1221
      %1300 = vmatpush.msra.mxu0 %v1219
      %1301 = vmatpush.msra.mxu0 %v1217
      %1302 = vmatpush.msra.mxu0 %v1215
      %1303 = vmatpush.msra.mxu0 %v1213
      %1304 = vmatpush.msra.mxu0 %v1211
      %1305 = vmatpush.msra.mxu0 %v1209
      %1306 = vmatpush.msra.mxu0 %v1207
      %1307 = vmatpush.msra.mxu0 %v1205
      %1308 = vmatpush.msra.mxu0 %v1203
      %1309 = vmatpush.msra.mxu0 %v1201
      %1310 = vmatpush.msra.mxu0 %v1199
      %1311 = vmatpush.msra.mxu0 %v1197
      %1312 = vmatpush.msra.mxu0 %v1195
      %1313 = vmatpush.msra.mxu0 %v1193
      %1314 = vmatmul.f32.gmra.mxu0 %v1192
      %v1315 = vpop.f32.mrf.mxu0
      %v1316 = vadd.f32 %v1276, %v1315
      %1317 = vdwg.mxu0
      %1318 = vmatpush.msra.mxu0 %v1224
      %1319 = vmatpush.msra.mxu0 %v1222
      %1320 = vmatpush.msra.mxu0 %v1220
      %1321 = vmatpush.msra.mxu0 %v1218
      %1322 = vmatpush.msra.mxu0 %v1216
      %1323 = vmatpush.msra.mxu0 %v1214
      %1324 = vmatpush.msra.mxu0 %v1212
      %1325 = vmatpush.msra.mxu0 %v1210
      %1326 = vmatpush.msra.mxu0 %v1208
      %1327 = vmatpush.msra.mxu0 %v1206
      %1328 = vmatpush.msra.mxu0 %v1204
      %1329 = vmatpush.msra.mxu0 %v1202
      %1330 = vmatpush.msra.mxu0 %v1200
      %1331 = vmatpush.msra.mxu0 %v1198
      %1332 = vmatpush.msra.mxu0 %v1196
      %1333 = vmatpush.msra.mxu0 %v1194
      %1334 = vmatmul.f32.gmra.mxu0 %v1192
      %v1335 = vpop.f32.mrf.mxu0
      %v1336 = vadd.f32 %v1296, %v1335
      %1337 = vdwg.mxu0
      %v1338 = vld [vmem:[#allocation3 + $0x2] sm:$0xf]
      %v1339 = vld [vmem:[%s7] sm:$0xff]
      %v1340 = vld [vmem:[%s7 + $0x8] sm:$0xff]
      %v1341 = vld [vmem:[%s7 + $0x10] sm:$0xff]
      %v1342 = vld [vmem:[%s7 + $0x18] sm:$0xff]
      %v1343 = vld [vmem:[%s7 + $0x20] sm:$0xff]
      %v1344 = vld [vmem:[%s7 + $0x28] sm:$0xff]
      %v1345 = vld [vmem:[%s7 + $0x30] sm:$0xff]
      %v1346 = vld [vmem:[%s7 + $0x38] sm:$0xff]
      %v1347 = vld [vmem:[%s7 + $0x40] sm:$0xff]
      %v1348 = vld [vmem:[%s7 + $0x48] sm:$0xff]
      %v1349 = vld [vmem:[%s7 + $0x50] sm:$0xff]
      %v1350 = vld [vmem:[%s7 + $0x58] sm:$0xff]
      %v1351 = vld [vmem:[%s7 + $0x60] sm:$0xff]
      %v1352 = vld [vmem:[%s7 + $0x68] sm:$0xff]
      %v1353 = vld [vmem:[%s7 + $0x70] sm:$0xff]
      %v1354 = vld [vmem:[%s7 + $0x78] sm:$0xff]
      %v1355 = vld [vmem:[%s7 + $0x80] sm:$0xff]
      %v1356 = vld [vmem:[%s7 + $0x88] sm:$0xff]
      %v1357 = vld [vmem:[%s7 + $0x90] sm:$0xff]
      %v1358 = vld [vmem:[%s7 + $0x98] sm:$0xff]
      %v1359 = vld [vmem:[%s7 + $0xa0] sm:$0xff]
      %v1360 = vld [vmem:[%s7 + $0xa8] sm:$0xff]
      %v1361 = vld [vmem:[%s7 + $0xb0] sm:$0xff]
      %v1362 = vld [vmem:[%s7 + $0xb8] sm:$0xff]
      %v1363 = vld [vmem:[%s7 + $0xc0] sm:$0xff]
      %v1364 = vld [vmem:[%s7 + $0xc8] sm:$0xff]
      %v1365 = vld [vmem:[%s7 + $0xd0] sm:$0xff]
      %v1366 = vld [vmem:[%s7 + $0xd8] sm:$0xff]
      %v1367 = vld [vmem:[%s7 + $0xe0] sm:$0xff]
      %v1368 = vld [vmem:[%s7 + $0xe8] sm:$0xff]
      %v1369 = vld [vmem:[%s7 + $0xf0] sm:$0xff]
      %v1370 = vld [vmem:[%s7 + $0xf8] sm:$0xff]
      %1371 = vmatpush.msra.mxu0 %v1369
      %1372 = vmatpush.msra.mxu0 %v1367
      %1373 = vmatpush.msra.mxu0 %v1365
      %1374 = vmatpush.msra.mxu0 %v1363
      %1375 = vmatpush.msra.mxu0 %v1361
      %1376 = vmatpush.msra.mxu0 %v1359
      %1377 = vmatpush.msra.mxu0 %v1357
      %1378 = vmatpush.msra.mxu0 %v1355
      %1379 = vmatpush.msra.mxu0 %v1353
      %1380 = vmatpush.msra.mxu0 %v1351
      %1381 = vmatpush.msra.mxu0 %v1349
      %1382 = vmatpush.msra.mxu0 %v1347
      %1383 = vmatpush.msra.mxu0 %v1345
      %1384 = vmatpush.msra.mxu0 %v1343
      %1385 = vmatpush.msra.mxu0 %v1341
      %1386 = vmatpush.msra.mxu0 %v1339
      %1387 = vmatmul.f32.gmra.mxu0 %v1338
      %v1388 = vpop.f32.mrf.mxu0
      %v1389 = vadd.f32 0.0, %v1388
      %1390 = vdwg.mxu0
      %1391 = vmatpush.msra.mxu0 %v1370
      %1392 = vmatpush.msra.mxu0 %v1368
      %1393 = vmatpush.msra.mxu0 %v1366
      %1394 = vmatpush.msra.mxu0 %v1364
      %1395 = vmatpush.msra.mxu0 %v1362
      %1396 = vmatpush.msra.mxu0 %v1360
      %1397 = vmatpush.msra.mxu0 %v1358
      %1398 = vmatpush.msra.mxu0 %v1356
      %1399 = vmatpush.msra.mxu0 %v1354
      %1400 = vmatpush.msra.mxu0 %v1352
      %1401 = vmatpush.msra.mxu0 %v1350
      %1402 = vmatpush.msra.mxu0 %v1348
      %1403 = vmatpush.msra.mxu0 %v1346
      %1404 = vmatpush.msra.mxu0 %v1344
      %1405 = vmatpush.msra.mxu0 %v1342
      %1406 = vmatpush.msra.mxu0 %v1340
      %1407 = vmatmul.f32.gmra.mxu0 %v1338
      %v1408 = vpop.f32.mrf.mxu0
      %v1409 = vadd.f32 0.0, %v1408
      %1410 = vdwg.mxu0
      %v1411 = vadd.f32 %v1316, %v1389
      %v1412 = vadd.f32 %v1336, %v1409
      %v1413 = vld [vmem:[%s14] ss:$4 sm:$0x3]
      %v1415 = vperm.slane %v1413, 0
      %v1416 = vperm.slane %v1413, 1
      %v1419 = vadd.f32 %v1411, %v1415
      %v1420 = vadd.f32 %v1412, %v1416
      %v1421 = vld [vmem:[%s11] sm:$0xff]
      %v1422 = vld [vmem:[%s11 + $0x8] sm:$0xff]
      %v1423 = vld [vmem:[%s11 + $0x10] sm:$0xff]
      %v1424 = vld [vmem:[%s11 + $0x18] sm:$0xff]
      %v1425 = vld [vmem:[%s11 + $0x20] sm:$0xff]
      %v1426 = vld [vmem:[%s11 + $0x28] sm:$0xff]
      %v1427 = vld [vmem:[%s11 + $0x30] sm:$0xff]
      %v1428 = vld [vmem:[%s11 + $0x38] sm:$0xff]
      %v1429 = vld [vmem:[%s11 + $0x40] sm:$0xff]
      %v1430 = vld [vmem:[%s11 + $0x48] sm:$0xff]
      %v1431 = vld [vmem:[%s11 + $0x50] sm:$0xff]
      %v1432 = vld [vmem:[%s11 + $0x58] sm:$0xff]
      %v1433 = vld [vmem:[%s11 + $0x60] sm:$0xff]
      %v1434 = vld [vmem:[%s11 + $0x68] sm:$0xff]
      %v1435 = vld [vmem:[%s11 + $0x70] sm:$0xff]
      %v1436 = vld [vmem:[%s11 + $0x78] sm:$0xff]
      %v1437 = vld [vmem:[%s11 + $0x80] sm:$0xff]
      %v1438 = vld [vmem:[%s11 + $0x88] sm:$0xff]
      %v1439 = vld [vmem:[%s11 + $0x90] sm:$0xff]
      %v1440 = vld [vmem:[%s11 + $0x98] sm:$0xff]
      %v1441 = vld [vmem:[%s11 + $0xa0] sm:$0xff]
      %v1442 = vld [vmem:[%s11 + $0xa8] sm:$0xff]
      %v1443 = vld [vmem:[%s11 + $0xb0] sm:$0xff]
      %v1444 = vld [vmem:[%s11 + $0xb8] sm:$0xff]
      %v1445 = vld [vmem:[%s11 + $0xc0] sm:$0xff]
      %v1446 = vld [vmem:[%s11 + $0xc8] sm:$0xff]
      %v1447 = vld [vmem:[%s11 + $0xd0] sm:$0xff]
      %v1448 = vld [vmem:[%s11 + $0xd8] sm:$0xff]
      %v1449 = vld [vmem:[%s11 + $0xe0] sm:$0xff]
      %v1450 = vld [vmem:[%s11 + $0xe8] sm:$0xff]
      %v1451 = vld [vmem:[%s11 + $0xf0] sm:$0xff]
      %v1452 = vld [vmem:[%s11 + $0xf8] sm:$0xff]
      %v1453 = vld [vmem:[%s11 + $0x100] sm:$0xff]
      %v1454 = vld [vmem:[%s11 + $0x108] sm:$0xff]
      %v1455 = vld [vmem:[%s11 + $0x110] sm:$0xff]
      %v1456 = vld [vmem:[%s11 + $0x118] sm:$0xff]
      %v1457 = vld [vmem:[%s11 + $0x120] sm:$0xff]
      %v1458 = vld [vmem:[%s11 + $0x128] sm:$0xff]
      %v1459 = vld [vmem:[%s11 + $0x130] sm:$0xff]
      %v1460 = vld [vmem:[%s11 + $0x138] sm:$0xff]
      %v1461 = vld [vmem:[%s11 + $0x140] sm:$0xff]
      %v1462 = vld [vmem:[%s11 + $0x148] sm:$0xff]
      %v1463 = vld [vmem:[%s11 + $0x150] sm:$0xff]
      %v1464 = vld [vmem:[%s11 + $0x158] sm:$0xff]
      %v1465 = vld [vmem:[%s11 + $0x160] sm:$0xff]
      %v1466 = vld [vmem:[%s11 + $0x168] sm:$0xff]
      %v1467 = vld [vmem:[%s11 + $0x170] sm:$0xff]
      %v1468 = vld [vmem:[%s11 + $0x178] sm:$0xff]
      %v1469 = vld [vmem:[%s11 + $0x180] sm:$0xff]
      %v1470 = vld [vmem:[%s11 + $0x188] sm:$0xff]
      %v1471 = vld [vmem:[%s11 + $0x190] sm:$0xff]
      %v1472 = vld [vmem:[%s11 + $0x198] sm:$0xff]
      %v1473 = vld [vmem:[%s11 + $0x1a0] sm:$0xff]
      %v1474 = vld [vmem:[%s11 + $0x1a8] sm:$0xff]
      %v1475 = vld [vmem:[%s11 + $0x1b0] sm:$0xff]
      %v1476 = vld [vmem:[%s11 + $0x1b8] sm:$0xff]
      %v1477 = vld [vmem:[%s11 + $0x1c0] sm:$0xff]
      %v1478 = vld [vmem:[%s11 + $0x1c8] sm:$0xff]
      %v1479 = vld [vmem:[%s11 + $0x1d0] sm:$0xff]
      %v1480 = vld [vmem:[%s11 + $0x1d8] sm:$0xff]
      %v1481 = vld [vmem:[%s11 + $0x1e0] sm:$0xff]
      %v1482 = vld [vmem:[%s11 + $0x1e8] sm:$0xff]
      %v1483 = vld [vmem:[%s11 + $0x1f0] sm:$0xff]
      %v1484 = vld [vmem:[%s11 + $0x1f8] sm:$0xff]
      %1485 = vmatpush.msra.mxu0 %v1451
      %1486 = vmatpush.msra.mxu0 %v1449
      %1487 = vmatpush.msra.mxu0 %v1447
      %1488 = vmatpush.msra.mxu0 %v1445
      %1489 = vmatpush.msra.mxu0 %v1443
      %1490 = vmatpush.msra.mxu0 %v1441
      %1491 = vmatpush.msra.mxu0 %v1439
      %1492 = vmatpush.msra.mxu0 %v1437
      %1493 = vmatpush.msra.mxu0 %v1435
      %1494 = vmatpush.msra.mxu0 %v1433
      %1495 = vmatpush.msra.mxu0 %v1431
      %1496 = vmatpush.msra.mxu0 %v1429
      %1497 = vmatpush.msra.mxu0 %v1427
      %1498 = vmatpush.msra.mxu0 %v1425
      %1499 = vmatpush.msra.mxu0 %v1423
      %1500 = vmatpush.msra.mxu0 %v1421
      %1501 = vmatmul.f32.gmra.mxu0 %v1419
      %v1502 = vpop.f32.mrf.mxu0
      %v1503 = vadd.f32 0.0, %v1502
      %1504 = vdwg.mxu0
      %1505 = vmatpush.msra.mxu0 %v1483
      %1506 = vmatpush.msra.mxu0 %v1481
      %1507 = vmatpush.msra.mxu0 %v1479
      %1508 = vmatpush.msra.mxu0 %v1477
      %1509 = vmatpush.msra.mxu0 %v1475
      %1510 = vmatpush.msra.mxu0 %v1473
      %1511 = vmatpush.msra.mxu0 %v1471
      %1512 = vmatpush.msra.mxu0 %v1469
      %1513 = vmatpush.msra.mxu0 %v1467
      %1514 = vmatpush.msra.mxu0 %v1465
      %1515 = vmatpush.msra.mxu0 %v1463
      %1516 = vmatpush.msra.mxu0 %v1461
      %1517 = vmatpush.msra.mxu0 %v1459
      %1518 = vmatpush.msra.mxu0 %v1457
      %1519 = vmatpush.msra.mxu0 %v1455
      %1520 = vmatpush.msra.mxu0 %v1453
      %1521 = vmatmul.f32.gmra.mxu0 %v1420
      %v1522 = vpop.f32.mrf.mxu0
      %v1523 = vadd.f32 %v1503, %v1522
      %1524 = vdwg.mxu0
      %1525 = vmatpush.msra.mxu0 %v1452
      %1526 = vmatpush.msra.mxu0 %v1450
      %1527 = vmatpush.msra.mxu0 %v1448
      %1528 = vmatpush.msra.mxu0 %v1446
      %1529 = vmatpush.msra.mxu0 %v1444
      %1530 = vmatpush.msra.mxu0 %v1442
      %1531 = vmatpush.msra.mxu0 %v1440
      %1532 = vmatpush.msra.mxu0 %v1438
      %1533 = vmatpush.msra.mxu0 %v1436
      %1534 = vmatpush.msra.mxu0 %v1434
      %1535 = vmatpush.msra.mxu0 %v1432
      %1536 = vmatpush.msra.mxu0 %v1430
      %1537 = vmatpush.msra.mxu0 %v1428
      %1538 = vmatpush.msra.mxu0 %v1426
      %1539 = vmatpush.msra.mxu0 %v1424
      %1540 = vmatpush.msra.mxu0 %v1422
      %1541 = vmatmul.f32.gmra.mxu0 %v1419
      %v1542 = vpop.f32.mrf.mxu0
      %v1543 = vadd.f32 0.0, %v1542
      %1544 = vdwg.mxu0
      %1545 = vmatpush.msra.mxu0 %v1484
      %1546 = vmatpush.msra.mxu0 %v1482
      %1547 = vmatpush.msra.mxu0 %v1480
      %1548 = vmatpush.msra.mxu0 %v1478
      %1549 = vmatpush.msra.mxu0 %v1476
      %1550 = vmatpush.msra.mxu0 %v1474
      %1551 = vmatpush.msra.mxu0 %v1472
      %1552 = vmatpush.msra.mxu0 %v1470
      %1553 = vmatpush.msra.mxu0 %v1468
      %1554 = vmatpush.msra.mxu0 %v1466
      %1555 = vmatpush.msra.mxu0 %v1464
      %1556 = vmatpush.msra.mxu0 %v1462
      %1557 = vmatpush.msra.mxu0 %v1460
      %1558 = vmatpush.msra.mxu0 %v1458
      %1559 = vmatpush.msra.mxu0 %v1456
      %1560 = vmatpush.msra.mxu0 %v1454
      %1561 = vmatmul.f32.gmra.mxu0 %v1420
      %v1562 = vpop.f32.mrf.mxu0
      %v1563 = vadd.f32 %v1543, %v1562
      %1564 = vdwg.mxu0
      %v1565 = vmul.f32 %v1419, %v1419
      %v1566 = vmul.f32 %v1420, %v1420
      %1567 = vmatpush.msra.mxu0 %v1451
      %1568 = vmatpush.msra.mxu0 %v1449
      %1569 = vmatpush.msra.mxu0 %v1447
      %1570 = vmatpush.msra.mxu0 %v1445
      %1571 = vmatpush.msra.mxu0 %v1443
      %1572 = vmatpush.msra.mxu0 %v1441
      %1573 = vmatpush.msra.mxu0 %v1439
      %1574 = vmatpush.msra.mxu0 %v1437
      %1575 = vmatpush.msra.mxu0 %v1435
      %1576 = vmatpush.msra.mxu0 %v1433
      %1577 = vmatpush.msra.mxu0 %v1431
      %1578 = vmatpush.msra.mxu0 %v1429
      %1579 = vmatpush.msra.mxu0 %v1427
      %1580 = vmatpush.msra.mxu0 %v1425
      %1581 = vmatpush.msra.mxu0 %v1423
      %1582 = vmatpush.msra.mxu0 %v1421
      %1583 = vmatmul.f32.gmra.mxu0 %v1565
      %v1584 = vpop.f32.mrf.mxu0
      %v1585 = vadd.f32 0.0, %v1584
      %1586 = vdwg.mxu0
      %1587 = vmatpush.msra.mxu0 %v1483
      %1588 = vmatpush.msra.mxu0 %v1481
      %1589 = vmatpush.msra.mxu0 %v1479
      %1590 = vmatpush.msra.mxu0 %v1477
      %1591 = vmatpush.msra.mxu0 %v1475
      %1592 = vmatpush.msra.mxu0 %v1473
      %1593 = vmatpush.msra.mxu0 %v1471
      %1594 = vmatpush.msra.mxu0 %v1469
      %1595 = vmatpush.msra.mxu0 %v1467
      %1596 = vmatpush.msra.mxu0 %v1465
      %1597 = vmatpush.msra.mxu0 %v1463
      %1598 = vmatpush.msra.mxu0 %v1461
      %1599 = vmatpush.msra.mxu0 %v1459
      %1600 = vmatpush.msra.mxu0 %v1457
      %1601 = vmatpush.msra.mxu0 %v1455
      %1602 = vmatpush.msra.mxu0 %v1453
      %1603 = vmatmul.f32.gmra.mxu0 %v1566
      %v1604 = vpop.f32.mrf.mxu0
      %v1605 = vadd.f32 %v1585, %v1604
      %1606 = vdwg.mxu0
      %1607 = vmatpush.msra.mxu0 %v1452
      %1608 = vmatpush.msra.mxu0 %v1450
      %1609 = vmatpush.msra.mxu0 %v1448
      %1610 = vmatpush.msra.mxu0 %v1446
      %1611 = vmatpush.msra.mxu0 %v1444
      %1612 = vmatpush.msra.mxu0 %v1442
      %1613 = vmatpush.msra.mxu0 %v1440
      %1614 = vmatpush.msra.mxu0 %v1438
      %1615 = vmatpush.msra.mxu0 %v1436
      %1616 = vmatpush.msra.mxu0 %v1434
      %1617 = vmatpush.msra.mxu0 %v1432
      %1618 = vmatpush.msra.mxu0 %v1430
      %1619 = vmatpush.msra.mxu0 %v1428
      %1620 = vmatpush.msra.mxu0 %v1426
      %1621 = vmatpush.msra.mxu0 %v1424
      %1622 = vmatpush.msra.mxu0 %v1422
      %1623 = vmatmul.f32.gmra.mxu0 %v1565
      %v1624 = vpop.f32.mrf.mxu0
      %v1625 = vadd.f32 0.0, %v1624
      %1626 = vdwg.mxu0
      %1627 = vmatpush.msra.mxu0 %v1484
      %1628 = vmatpush.msra.mxu0 %v1482
      %1629 = vmatpush.msra.mxu0 %v1480
      %1630 = vmatpush.msra.mxu0 %v1478
      %1631 = vmatpush.msra.mxu0 %v1476
      %1632 = vmatpush.msra.mxu0 %v1474
      %1633 = vmatpush.msra.mxu0 %v1472
      %1634 = vmatpush.msra.mxu0 %v1470
      %1635 = vmatpush.msra.mxu0 %v1468
      %1636 = vmatpush.msra.mxu0 %v1466
      %1637 = vmatpush.msra.mxu0 %v1464
      %1638 = vmatpush.msra.mxu0 %v1462
      %1639 = vmatpush.msra.mxu0 %v1460
      %1640 = vmatpush.msra.mxu0 %v1458
      %1641 = vmatpush.msra.mxu0 %v1456
      %1642 = vmatpush.msra.mxu0 %v1454
      %1643 = vmatmul.f32.gmra.mxu0 %v1566
      %v1644 = vpop.f32.mrf.mxu0
      %v1645 = vadd.f32 %v1625, %v1644
      %1646 = vdwg.mxu0
      %v1647 = vmul.f32 %v1523, %v1523
      %v1648 = vmul.f32 %v1563, %v1563
      %v1649 = vsub.f32 %v1605, %v1647
      %v1650 = vsub.f32 %v1645, %v1648
      %v1651 = vmax.f32 %v1649, 0.0
      %v1652 = vmax.f32 %v1650, 0.0
      %v1653 = vsub.f32 %v1419, %v1523
      %v1654 = vsub.f32 %v1420, %v1563
      %v1655 = vadd.f32 %v1651, 1e-06
      %v1656 = vadd.f32 %v1652, 1e-06
      %v1657 = vrsqrt.pop %v1655
      %v1658 = vmul.f32 %v1657, %v1655
      %v1659 = vmul.f32 %v1658, %v1657
      %v1660 = vmul.f32 0.5, %v1659
      %v1661 = vsub.f32 1.5, %v1660
      %v1662 = vmul.f32 %v1657, %v1661
      %vm1663 = vweird.f32 %v1655
      %vm1664 = vweird.f32 %v1657
      %vm1665 = vmor %vm1663, %vm1664
      %v1666 = vsel %vm1665, %v1657, %v1662
      %v1667 = vrsqrt.pop %v1656
      %v1668 = vmul.f32 %v1667, %v1656
      %v1669 = vmul.f32 %v1668, %v1667
      %v1670 = vmul.f32 0.5, %v1669
      %v1671 = vsub.f32 1.5, %v1670
      %v1672 = vmul.f32 %v1667, %v1671
      %vm1673 = vweird.f32 %v1656
      %vm1674 = vweird.f32 %v1667
      %vm1675 = vmor %vm1673, %vm1674
      %v1676 = vsel %vm1675, %v1667, %v1672
      %v1677 = vmul.f32 %v1653, %v1666
      %v1678 = vmul.f32 %v1654, %v1676
      %s1679 = scalar_lea.vmem %s14, 1
      %v1680 = vld [vmem:[%s1679] ss:$4 sm:$0x3]
      %v1682 = vperm.slane %v1680, 0
      %v1683 = vperm.slane %v1680, 1
      %v1686 = vmul.f32 %v1677, %v1682
      %v1687 = vmul.f32 %v1678, %v1683
      %s1688 = scalar_lea.vmem %s14, 2
      %v1689 = vld [vmem:[%s1688] ss:$4 sm:$0x3]
      %v1691 = vperm.slane %v1689, 0
      %v1692 = vperm.slane %v1689, 1
      %v1695 = vadd.f32 %v1686, %v1691
      %v1696 = vadd.f32 %v1687, %v1692
      %v1697 = vmul.f32 %v1695, 0.5
      %v1698 = vmul.f32 %v1696, 0.5
      %v1699 = vmul.f32 %v1695, 0.044715
      %v1700 = vmul.f32 %v1696, 0.044715
      %v1701 = vmul.f32 %v1699, %v1695
      %v1702 = vmul.f32 %v1700, %v1696
      %v1703 = vmul.f32 %v1701, %v1695
      %v1704 = vmul.f32 %v1702, %v1696
      %v1705 = vadd.f32 %v1695, %v1703
      %v1706 = vadd.f32 %v1696, %v1704
      %v1707 = vmul.f32 %v1705, 0.7978846
      %v1708 = vmul.f32 %v1706, 0.7978846
      %v1709 = vtanh.pop %v1707
      %v1710 = vtanh.pop %v1708
      %v1711 = vadd.f32 %v1709, 1.0
      %v1712 = vadd.f32 %v1710, 1.0
      %v1713 = vmul.f32 %v1697, %v1711
      %v1714 = vmul.f32 %v1698, %v1712
      %v1715 = vld [vmem:[%s8] sm:$0xff]
      %v1716 = vld [vmem:[%s8 + $0x8] sm:$0xff]
      %v1717 = vld [vmem:[%s8 + $0x10] sm:$0xff]
      %v1718 = vld [vmem:[%s8 + $0x18] sm:$0xff]
      %v1719 = vld [vmem:[%s8 + $0x20] sm:$0xff]
      %v1720 = vld [vmem:[%s8 + $0x28] sm:$0xff]
      %v1721 = vld [vmem:[%s8 + $0x30] sm:$0xff]
      %v1722 = vld [vmem:[%s8 + $0x38] sm:$0xff]
      %v1723 = vld [vmem:[%s8 + $0x40] sm:$0xff]
      %v1724 = vld [vmem:[%s8 + $0x48] sm:$0xff]
      %v1725 = vld [vmem:[%s8 + $0x50] sm:$0xff]
      %v1726 = vld [vmem:[%s8 + $0x58] sm:$0xff]
      %v1727 = vld [vmem:[%s8 + $0x60] sm:$0xff]
      %v1728 = vld [vmem:[%s8 + $0x68] sm:$0xff]
      %v1729 = vld [vmem:[%s8 + $0x70] sm:$0xff]
      %v1730 = vld [vmem:[%s8 + $0x78] sm:$0xff]
      %v1731 = vld [vmem:[%s8 + $0x80] sm:$0xff]
      %v1732 = vld [vmem:[%s8 + $0x88] sm:$0xff]
      %v1733 = vld [vmem:[%s8 + $0x90] sm:$0xff]
      %v1734 = vld [vmem:[%s8 + $0x98] sm:$0xff]
      %v1735 = vld [vmem:[%s8 + $0xa0] sm:$0xff]
      %v1736 = vld [vmem:[%s8 + $0xa8] sm:$0xff]
      %v1737 = vld [vmem:[%s8 + $0xb0] sm:$0xff]
      %v1738 = vld [vmem:[%s8 + $0xb8] sm:$0xff]
      %v1739 = vld [vmem:[%s8 + $0xc0] sm:$0xff]
      %v1740 = vld [vmem:[%s8 + $0xc8] sm:$0xff]
      %v1741 = vld [vmem:[%s8 + $0xd0] sm:$0xff]
      %v1742 = vld [vmem:[%s8 + $0xd8] sm:$0xff]
      %v1743 = vld [vmem:[%s8 + $0xe0] sm:$0xff]
      %v1744 = vld [vmem:[%s8 + $0xe8] sm:$0xff]
      %v1745 = vld [vmem:[%s8 + $0xf0] sm:$0xff]
      %v1746 = vld [vmem:[%s8 + $0xf8] sm:$0xff]
      %v1747 = vld [vmem:[%s8 + $0x100] sm:$0xff]
      %v1748 = vld [vmem:[%s8 + $0x108] sm:$0xff]
      %v1749 = vld [vmem:[%s8 + $0x110] sm:$0xff]
      %v1750 = vld [vmem:[%s8 + $0x118] sm:$0xff]
      %v1751 = vld [vmem:[%s8 + $0x120] sm:$0xff]
      %v1752 = vld [vmem:[%s8 + $0x128] sm:$0xff]
      %v1753 = vld [vmem:[%s8 + $0x130] sm:$0xff]
      %v1754 = vld [vmem:[%s8 + $0x138] sm:$0xff]
      %v1755 = vld [vmem:[%s8 + $0x140] sm:$0xff]
      %v1756 = vld [vmem:[%s8 + $0x148] sm:$0xff]
      %v1757 = vld [vmem:[%s8 + $0x150] sm:$0xff]
      %v1758 = vld [vmem:[%s8 + $0x158] sm:$0xff]
      %v1759 = vld [vmem:[%s8 + $0x160] sm:$0xff]
      %v1760 = vld [vmem:[%s8 + $0x168] sm:$0xff]
      %v1761 = vld [vmem:[%s8 + $0x170] sm:$0xff]
      %v1762 = vld [vmem:[%s8 + $0x178] sm:$0xff]
      %v1763 = vld [vmem:[%s8 + $0x180] sm:$0xff]
      %v1764 = vld [vmem:[%s8 + $0x188] sm:$0xff]
      %v1765 = vld [vmem:[%s8 + $0x190] sm:$0xff]
      %v1766 = vld [vmem:[%s8 + $0x198] sm:$0xff]
      %v1767 = vld [vmem:[%s8 + $0x1a0] sm:$0xff]
      %v1768 = vld [vmem:[%s8 + $0x1a8] sm:$0xff]
      %v1769 = vld [vmem:[%s8 + $0x1b0] sm:$0xff]
      %v1770 = vld [vmem:[%s8 + $0x1b8] sm:$0xff]
      %v1771 = vld [vmem:[%s8 + $0x1c0] sm:$0xff]
      %v1772 = vld [vmem:[%s8 + $0x1c8] sm:$0xff]
      %v1773 = vld [vmem:[%s8 + $0x1d0] sm:$0xff]
      %v1774 = vld [vmem:[%s8 + $0x1d8] sm:$0xff]
      %v1775 = vld [vmem:[%s8 + $0x1e0] sm:$0xff]
      %v1776 = vld [vmem:[%s8 + $0x1e8] sm:$0xff]
      %v1777 = vld [vmem:[%s8 + $0x1f0] sm:$0xff]
      %v1778 = vld [vmem:[%s8 + $0x1f8] sm:$0xff]
      %v1779 = vld [vmem:[%s15] sm:$0x3]
      %v1781 = vperm.slane %v1779, 0
      %v1782 = vperm.slane %v1779, 1
      %1785 = vmatpush.msra.mxu0 %v1745
      %1786 = vmatpush.msra.mxu0 %v1743
      %1787 = vmatpush.msra.mxu0 %v1741
      %1788 = vmatpush.msra.mxu0 %v1739
      %1789 = vmatpush.msra.mxu0 %v1737
      %1790 = vmatpush.msra.mxu0 %v1735
      %1791 = vmatpush.msra.mxu0 %v1733
      %1792 = vmatpush.msra.mxu0 %v1731
      %1793 = vmatpush.msra.mxu0 %v1729
      %1794 = vmatpush.msra.mxu0 %v1727
      %1795 = vmatpush.msra.mxu0 %v1725
      %1796 = vmatpush.msra.mxu0 %v1723
      %1797 = vmatpush.msra.mxu0 %v1721
      %1798 = vmatpush.msra.mxu0 %v1719
      %1799 = vmatpush.msra.mxu0 %v1717
      %1800 = vmatpush.msra.mxu0 %v1715
      %1801 = vmatmul.f32.gmra.mxu0 %v1713
      %v1802 = vpop.f32.mrf.mxu0
      %v1803 = vadd.f32 %v1781, %v1802
      %1804 = vdwg.mxu0
      %1805 = vmatpush.msra.mxu0 %v1777
      %1806 = vmatpush.msra.mxu0 %v1775
      %1807 = vmatpush.msra.mxu0 %v1773
      %1808 = vmatpush.msra.mxu0 %v1771
      %1809 = vmatpush.msra.mxu0 %v1769
      %1810 = vmatpush.msra.mxu0 %v1767
      %1811 = vmatpush.msra.mxu0 %v1765
      %1812 = vmatpush.msra.mxu0 %v1763
      %1813 = vmatpush.msra.mxu0 %v1761
      %1814 = vmatpush.msra.mxu0 %v1759
      %1815 = vmatpush.msra.mxu0 %v1757
      %1816 = vmatpush.msra.mxu0 %v1755
      %1817 = vmatpush.msra.mxu0 %v1753
      %1818 = vmatpush.msra.mxu0 %v1751
      %1819 = vmatpush.msra.mxu0 %v1749
      %1820 = vmatpush.msra.mxu0 %v1747
      %1821 = vmatmul.f32.gmra.mxu0 %v1714
      %v1822 = vpop.f32.mrf.mxu0
      %v1823 = vadd.f32 %v1803, %v1822
      %1824 = vdwg.mxu0
      %1825 = vmatpush.msra.mxu0 %v1746
      %1826 = vmatpush.msra.mxu0 %v1744
      %1827 = vmatpush.msra.mxu0 %v1742
      %1828 = vmatpush.msra.mxu0 %v1740
      %1829 = vmatpush.msra.mxu0 %v1738
      %1830 = vmatpush.msra.mxu0 %v1736
      %1831 = vmatpush.msra.mxu0 %v1734
      %1832 = vmatpush.msra.mxu0 %v1732
      %1833 = vmatpush.msra.mxu0 %v1730
      %1834 = vmatpush.msra.mxu0 %v1728
      %1835 = vmatpush.msra.mxu0 %v1726
      %1836 = vmatpush.msra.mxu0 %v1724
      %1837 = vmatpush.msra.mxu0 %v1722
      %1838 = vmatpush.msra.mxu0 %v1720
      %1839 = vmatpush.msra.mxu0 %v1718
      %1840 = vmatpush.msra.mxu0 %v1716
      %1841 = vmatmul.f32.gmra.mxu0 %v1713
      %v1842 = vpop.f32.mrf.mxu0
      %v1843 = vadd.f32 %v1782, %v1842
      %1844 = vdwg.mxu0
      %1845 = vmatpush.msra.mxu0 %v1778
      %1846 = vmatpush.msra.mxu0 %v1776
      %1847 = vmatpush.msra.mxu0 %v1774
      %1848 = vmatpush.msra.mxu0 %v1772
      %1849 = vmatpush.msra.mxu0 %v1770
      %1850 = vmatpush.msra.mxu0 %v1768
      %1851 = vmatpush.msra.mxu0 %v1766
      %1852 = vmatpush.msra.mxu0 %v1764
      %1853 = vmatpush.msra.mxu0 %v1762
      %1854 = vmatpush.msra.mxu0 %v1760
      %1855 = vmatpush.msra.mxu0 %v1758
      %1856 = vmatpush.msra.mxu0 %v1756
      %1857 = vmatpush.msra.mxu0 %v1754
      %1858 = vmatpush.msra.mxu0 %v1752
      %1859 = vmatpush.msra.mxu0 %v1750
      %1860 = vmatpush.msra.mxu0 %v1748
      %1861 = vmatmul.f32.gmra.mxu0 %v1714
      %v1862 = vpop.f32.mrf.mxu0
      %v1863 = vadd.f32 %v1843, %v1862
      %1864 = vdwg.mxu0
      %v1867 = vrot.slane %v1863, 4
      %vm1868 = vcmask 1043456
      %v1869 = vsel %vm1868, %v1823, %v1867
      %1871 = vst [vmem:[%s518] sm:$0xff] %v1869
      %p1872 = scmp.lt.s32.totalorder %s27, 1
      %s1873 = scalar_select %p1872, %s27, 1
      %s1874 = smul.addr %s1873, 2
      %s1875 = smul.addr %s1874, 4
      %s1876 = scalar_lea.vmem %s16, %s1875
      // Predicated region
      $region85: #{mask_downsampler_forward.1} parent=83 // pred_check
        %p1877 = pneg %p386
      $region86: #{mask_downsampler_forward.1} parent=83 // pred_check_branch
        %1879 = sbr.rel (%p1877) target = $region88
      $region87: #{mask_downsampler_forward.1} parent=83 // pred_region
        _
      $region88: #{mask_downsampler_forward.1} parent=83 // pred_fallthru
        _
    $region84: #{mask_downsampler_forward.1} parent=5 // pred_fallthru
      _
    %p1880 = scmp.le.s32.totalorder 2, %s22
    // Predicated region
    $region89: #{mask_downsampler_forward.1} parent=5 // pred_check
      %p1881 = pneg %p1880
    $region90: #{mask_downsampler_forward.1} parent=5 // pred_check_branch
      %1883 = sbr.rel (%p1881) target = $region92
    $region91: #{mask_downsampler_forward.1} parent=5 // pred_region
      %s1884 = ssub.s32 %s22, 2
      // Predicated region
      $region93: #{mask_downsampler_forward.1} parent=91 // pred_check
        %p1885 = pneg %p392
      $region94: #{mask_downsampler_forward.1} parent=91 // pred_check_branch
        %1887 = sbr.rel (%p1885) target = $region96
      $region95: #{mask_downsampler_forward.1} parent=91 // pred_region
        %p1888 = scmp.lt.s32.totalorder %s28, 1
        %s1889 = scalar_select %p1888, %s28, 1
        %s1890 = smul.addr %s1889, 2
        %s1891 = smul.addr %s1890, 4
        %s1892 = scalar_lea.vmem %s16, %s1891
      $region96: #{mask_downsampler_forward.1} parent=91 // pred_fallthru
        _
    $region92: #{mask_downsampler_forward.1} parent=5 // pred_fallthru
      _
  $region6: #{mask_downsampler_forward.1} parent=0 // loop_footer
    %s26 = sadd.s32 1, %s22
  $region7: #{mask_downsampler_forward.1} parent=0 // loop_footer_branch
    %21 = sbr.rel target = $region3
  $region8: #{mask_downsampler_forward.1} parent=0 // loop_exit
    _

</llo_original>
